<compile_context>
chip_gen: v6e
topology: v6e:2x2x1
jax: 0.10.0
libtpu: 0.0.40
codegen_flags: <defaults>
</compile_context>

<pallas_src>
import functools

import jax
import jax.numpy as jnp
from jax import lax
from jax.experimental import pallas as pl
from jax.experimental.pallas import tpu as pltpu


def _resblock_kernel(x_ref, w1_ref, w2_ref, b_ref, out_ref, *, img_rows):
    # x_ref:   (TM, W*C)     f32 activations; TM = tn * img_rows stacked images
    # w*_ref:  (3, W*C, W*C) banded row-weights (BN scale folded), MXU dtype
    # b_ref:   (2, 1, W*C)   f32 folded BN shifts (bn1, bn2), tiled across W
    # out_ref: (TM, W*C)     f32
    TM, WC = out_ref.shape
    cdt = w1_ref.dtype                          # MXU operand dtype (bf16 or f32)

    # Within-image row index -> masks for the +/-1 row taps (no cross-image or
    # wrap-around bleed).  Constant per shape; (TM, 1) = 1 vreg each.
    row = lax.broadcasted_iota(jnp.int32, (TM, 1), 0) % img_rows
    has_above = row > 0
    has_below = row < img_rows - 1

    x = x_ref[...]                              # (TM, WC), f32

    def shift_down(a):                          # a_dn[m] = a[m-1] within image, else 0
        a_dn = jnp.concatenate([jnp.zeros((1, WC), a.dtype), a[:-1]], axis=0)
        return jnp.where(has_above, a_dn, 0.0)

    def shift_up(a):                            # a_up[m] = a[m+1] within image, else 0
        a_up = jnp.concatenate([a[1:], jnp.zeros((1, WC), a.dtype)], axis=0)
        return jnp.where(has_below, a_up, 0.0)

    def conv3x3(a, w_ref):
        # Width taps + zero "same" width padding live inside the banded
        # (W*C, W*C) matrices, so a 3x3 conv is 3 row-tap MXU matmuls with
        # K = W*C and f32 accumulation.
        acc = jnp.dot(a.astype(cdt), w_ref[1],
                      preferred_element_type=jnp.float32)
        acc += jnp.dot(shift_down(a).astype(cdt), w_ref[0],
                       preferred_element_type=jnp.float32)
        acc += jnp.dot(shift_up(a).astype(cdt), w_ref[2],
                       preferred_element_type=jnp.float32)
        return acc

    # conv1 -> bn1 (scale folded into w1, shift here) -> relu
    y1 = jnp.maximum(conv3x3(x, w1_ref) + b_ref[0], 0.0)
    # conv2 -> bn2 (scale folded into w2)
    y2 = conv3x3(y1, w2_ref) + b_ref[1]
    # identity skip (exact f32 input) + relu
    out_ref[...] = jnp.maximum(y2 + x, 0.0).astype(out_ref.dtype)


def _row_weights(w_hwio, W):
    """(KH, KW, Cin, Cout) conv weight -> (KH, W*Cin, W*Cout) banded matrices.

    Row kh maps the lane-dense (w_in*Cin + ci) input layout to the
    (w_out*Cout + co) output layout for that kernel row; out-of-range width
    taps are zero columns, i.e. the "same" width padding is folded in.
    """
    KH, KW, Cin, Cout = w_hwio.shape
    kw = jnp.arange(KW)[:, None, None]
    wi = jnp.arange(W)[None, :, None]
    wo = jnp.arange(W)[None, None, :]
    mask = (wi == wo + kw - (KW // 2)).astype(w_hwio.dtype)    # (KW, W, W)
    band = jnp.einsum("kpw,hkio->hpiwo", mask, w_hwio)         # (KH, W, Cin, W, Cout)
    return band.reshape(KH, W * Cin, W * Cout)


def _fold_bn(gamma, beta, rmean, rvar, eps):
    s = gamma / jnp.sqrt(rvar + eps)
    return s, beta - rmean * s


def _resblock_nhwc(x_nhwc, w1_oihw, gamma1, beta1, rmean1, rvar1,
                   w2_oihw, gamma2, beta2, rmean2, rvar2,
                   eps, mxu_dtype, tn):
    N, H, W, C = x_nhwc.shape
    WC = W * C

    if tn is None:
        # Two grid steps by default (keeps both v7x TensorCores busy) while
        # maximizing M = tn*H per MXU matmul.  Tune for very large N*H.
        tn = N // 2 if N % 2 == 0 else N
    assert N % tn == 0, "batch must be divisible by tn"
    TM = tn * H
    assert TM % 8 == 0 or N // tn == 1, "tn*H must be a multiple of 8"

    # Lane-dense activation slab: rows index (image, h).  Free reshape, no
    # transpose, skip path stays exact f32.
    xd = x_nhwc.reshape(N * H, WC).astype(jnp.float32)

    # Fold eval-mode BN: scale into the conv output channels, shift stays.
    s1, b1 = _fold_bn(gamma1, beta1, rmean1, rvar1, eps)
    s2, b2 = _fold_bn(gamma2, beta2, rmean2, rvar2, eps)

    def band(w_oihw, s):
        w_hwio = jnp.transpose(w_oihw, (2, 3, 1, 0)).astype(jnp.float32) * s
        return _row_weights(w_hwio, W).astype(mxu_dtype)

    w1 = band(w1_oihw, s1)                                     # (3, WC, WC)
    w2 = band(w2_oihw, s2)
    shifts = jnp.stack([jnp.tile(b1, W), jnp.tile(b2, W)])
    shifts = shifts.reshape(2, 1, WC).astype(jnp.float32)

    w_bytes = 2 * 3 * WC * WC * jnp.dtype(mxu_dtype).itemsize  # single-buffered
    io_bytes = 2 * 2 * TM * WC * 4                             # x+out, double-buffered
    vmem_limit = int(min(48 << 20, max(16 << 20, 4 * (w_bytes + io_bytes))))

    single_buf = dict(pipeline_mode=pl.Buffered(1))            # grid-invariant operands

    out_dense = pl.pallas_call(
        functools.partial(_resblock_kernel, img_rows=H),
        out_shape=jax.ShapeDtypeStruct((N * H, WC), jnp.float32),
        grid=(N // tn,),
        in_specs=[
            pl.BlockSpec((TM, WC), lambda n: (n, 0)),                    # x
            pl.BlockSpec((3, WC, WC), lambda n: (0, 0, 0), **single_buf),  # w1
            pl.BlockSpec((3, WC, WC), lambda n: (0, 0, 0), **single_buf),  # w2
            pl.BlockSpec((2, 1, WC), lambda n: (0, 0, 0), **single_buf),   # shifts
        ],
        out_specs=pl.BlockSpec((TM, WC), lambda n: (n, 0)),
        compiler_params=pltpu.CompilerParams(
            dimension_semantics=("parallel",),                  # v7x: 2 TCs
            vmem_limit_bytes=vmem_limit),
    )(xd, w1, w2, shifts)

    return out_dense.reshape(N, H, W, C)


@functools.partial(jax.jit, static_argnames=("eps", "mxu_dtype", "tn"))
def resblock_forward_nhwc(x_nhwc, w1_oihw, gamma1, beta1, rmean1, rvar1,
                          w2_oihw, gamma2, beta2, rmean2, rvar2,
                          eps=1e-5, mxu_dtype=jnp.bfloat16, tn=None):
    """ResBlock forward on NHWC activations (no layout transposes)."""
    return _resblock_nhwc(x_nhwc, w1_oihw, gamma1, beta1, rmean1, rvar1,
                          w2_oihw, gamma2, beta2, rmean2, rvar2,
                          eps, mxu_dtype, tn)


@functools.partial(jax.jit, static_argnames=("eps", "mxu_dtype", "tn"))
def resblock_forward(x_nchw, w1_oihw, gamma1, beta1, rmean1, rvar1,
                     w2_oihw, gamma2, beta2, rmean2, rvar2,
                     eps=1e-5, mxu_dtype=jnp.bfloat16, tn=None):
    """ResBlock forward, PyTorch NCHW layout (adds one transpose each way)."""
    x = jnp.transpose(x_nchw, (0, 2, 3, 1))
    out = _resblock_nhwc(x, w1_oihw, gamma1, beta1, rmean1, rvar1,
                         w2_oihw, gamma2, beta2, rmean2, rvar2,
                         eps, mxu_dtype, tn)
    return jnp.transpose(out, (0, 3, 1, 2))


def _reference_forward(x, w1, g1, b1, rm1, rv1, w2, g2, b2, rm2, rv2, eps=1e-5):
    """Pure-JAX NCHW reference mirroring the PyTorch forward (eval-mode BN)."""
    dn = ("NCHW", "OIHW", "NCHW")
    prec = lax.Precision.HIGHEST

    def bn(y, g, b, rm, rv):
        s = g / jnp.sqrt(rv + eps)
        return y * s[None, :, None, None] + (b - rm * s)[None, :, None, None]

    out = lax.conv_general_dilated(x, w1, (1, 1), "SAME",
                                   dimension_numbers=dn, precision=prec)
    out = jax.nn.relu(bn(out, g1, b1, rm1, rv1))
    out = lax.conv_general_dilated(out, w2, (1, 1), "SAME",
                                   dimension_numbers=dn, precision=prec)
    out = bn(out, g2, b2, rm2, rv2)
    return jax.nn.relu(out + x)


if __name__ == "__main__":
    # W*C = 16*8 = 128 lanes; tn = N/2 = 8 images/step -> M = tn*H = 128 rows
    # per MXU matmul, grid=(2,) "parallel".
    N, C, H, W = 16, 8, 16, 16   # in_planes == out_planes (downsample=None)
    key = jax.random.PRNGKey(0)
    keys = jax.random.split(key, 11)

    x = jax.random.normal(keys[0], (N, C, H, W), jnp.float32)

    # conv weights in PyTorch OIHW layout (bias=False in the module)
    w1 = 0.1 * jax.random.normal(keys[1], (C, C, 3, 3), jnp.float32)
    w2 = 0.1 * jax.random.normal(keys[2], (C, C, 3, 3), jnp.float32)

    # BatchNorm params / running stats (eval mode)
    gamma1 = 1.0 + 0.1 * jax.random.normal(keys[3], (C,), jnp.float32)
    beta1 = 0.1 * jax.random.normal(keys[4], (C,), jnp.float32)
    rmean1 = 0.1 * jax.random.normal(keys[5], (C,), jnp.float32)
    rvar1 = 0.5 + jnp.abs(jax.random.normal(keys[6], (C,), jnp.float32))
    gamma2 = 1.0 + 0.1 * jax.random.normal(keys[7], (C,), jnp.float32)
    beta2 = 0.1 * jax.random.normal(keys[8], (C,), jnp.float32)
    rmean2 = 0.1 * jax.random.normal(keys[9], (C,), jnp.float32)
    rvar2 = 0.5 + jnp.abs(jax.random.normal(keys[10], (C,), jnp.float32))

    ref = _reference_forward(x, w1, gamma1, beta1, rmean1, rvar1,
                             w2, gamma2, beta2, rmean2, rvar2)

    # f32 MXU operands (tight-ish; allows for MXU default-precision differences).
    out_f32 = resblock_forward(x, w1, gamma1, beta1, rmean1, rvar1,
                               w2, gamma2, beta2, rmean2, rvar2,
                               mxu_dtype=jnp.float32)
    out_f32 = jax.block_until_ready(out_f32)
    assert out_f32.shape == (N, C, H, W)
    assert jnp.allclose(out_f32, ref, atol=5e-2, rtol=1e-2), \
        f"f32 max abs err = {jnp.max(jnp.abs(out_f32 - ref))}"

    # Default bf16 MXU operands (fast path on v5e/v6e/v7x), f32 skip/epilogue.
    out_bf16 = resblock_forward(x, w1, gamma1, beta1, rmean1, rvar1,
                                w2, gamma2, beta2, rmean2, rvar2)
    out_bf16 = jax.block_until_ready(out_bf16)
    assert jnp.allclose(out_bf16, ref, atol=2e-1, rtol=5e-2), \
        f"bf16 max abs err = {jnp.max(jnp.abs(out_bf16 - ref))}"

    # NHWC / lane-dense native path (no wrapper transposes at all).
    x_nhwc = jnp.transpose(x, (0, 2, 3, 1))
    out_nhwc = resblock_forward_nhwc(x_nhwc, w1, gamma1, beta1, rmean1, rvar1,
                                     w2, gamma2, beta2, rmean2, rvar2)
    out_nhwc = jax.block_until_ready(out_nhwc)
    assert out_nhwc.shape == (N, H, W, C)
    assert jnp.allclose(jnp.transpose(out_nhwc, (0, 3, 1, 2)), ref,
                        atol=2e-1, rtol=5e-2), \
        f"nhwc max abs err = {jnp.max(jnp.abs(jnp.transpose(out_nhwc, (0, 3, 1, 2)) - ref))}"

    print("KERNEL_OK")
</pallas_src>

<mosaic_0001>
module attributes {stable_mosaic.version = 11 : i64} {
  func.func @_resblock_kernel(%arg0: i32, %arg1: memref<128x128xf32, #tpu.memory_space<vmem>>, %arg2: memref<3x128x128xf32, #tpu.memory_space<vmem>>, %arg3: memref<3x128x128xf32, #tpu.memory_space<vmem>>, %arg4: memref<2x1x128xf32, #tpu.memory_space<vmem>>, %arg5: memref<128x128xf32, #tpu.memory_space<vmem>>) attributes {dimension_semantics = [#tpu.dimension_semantics<parallel>], iteration_bounds = array<i64: 2>, scalar_prefetch = 0 : i64, scratch_operands = 0 : i64, tpu.core_type = #tpu.core_type<tc>, window_params = [{transform_indices = @transform_0, window_bounds = array<i64: 128, 128>}, {pipeline_mode = #tpu.pipeline_mode<synchronous>, transform_indices = @transform_1, window_bounds = array<i64: 3, 128, 128>}, {pipeline_mode = #tpu.pipeline_mode<synchronous>, transform_indices = @transform_2, window_bounds = array<i64: 3, 128, 128>}, {pipeline_mode = #tpu.pipeline_mode<synchronous>, transform_indices = @transform_3, window_bounds = array<i64: 2, 1, 128>}, {transform_indices = @transform_4, window_bounds = array<i64: 128, 128>}]} {
    %0 = tpu.iota {dimensions = array<i32: 0>} : vector<128x1xi32>
    %c16_i32 = arith.constant 16 : i32
    %c0_i32 = arith.constant 0 : i32
    %1 = arith.cmpi eq, %c16_i32, %c0_i32 : i32
    %c1_i32 = arith.constant 1 : i32
    %2 = arith.select %1, %c1_i32, %c16_i32 : i32
    %3 = vector.broadcast %2 : i32 to vector<128x1xi32>
    %4 = arith.remsi %0, %3 : vector<128x1xi32>
    %c0_i32_0 = arith.constant 0 : i32
    %5 = vector.broadcast %c0_i32_0 : i32 to vector<128x1xi32>
    %6 = arith.cmpi ne, %4, %5 : vector<128x1xi32>
    %c0_i32_1 = arith.constant 0 : i32
    %7 = vector.broadcast %c0_i32_1 : i32 to vector<128x1xi32>
    %8 = arith.cmpi slt, %4, %7 : vector<128x1xi32>
    %c0_i32_2 = arith.constant 0 : i32
    %9 = arith.cmpi slt, %2, %c0_i32_2 : i32
    %10 = vector.broadcast %9 : i1 to vector<128x1xi1>
    %11 = vector.broadcast %10 : vector<128x1xi1> to vector<128x1xi1>
    %12 = arith.xori %8, %11 : vector<128x1xi1>
    %13 = arith.andi %12, %6 : vector<128x1xi1>
    %14 = vector.broadcast %2 : i32 to vector<128x1xi32>
    %15 = arith.addi %4, %14 : vector<128x1xi32>
    %16 = arith.select %13, %15, %4 : vector<128x1xi1>, vector<128x1xi32>
    %c0_i32_3 = arith.constant 0 : i32
    %17 = vector.broadcast %c0_i32_3 : i32 to vector<128x1xi32>
    %18 = arith.cmpi sgt, %16, %17 : vector<128x1xi32>
    %c15_i32 = arith.constant 15 : i32
    %19 = vector.broadcast %c15_i32 : i32 to vector<128x1xi32>
    %20 = arith.cmpi slt, %16, %19 : vector<128x1xi32>
    %c0 = arith.constant 0 : index
    %c0_4 = arith.constant 0 : index
    %21 = vector.load %arg1[%c0, %c0_4] : memref<128x128xf32, #tpu.memory_space<vmem>>, vector<128x128xf32>
    %c1 = arith.constant 1 : index
    %c0_5 = arith.constant 0 : index
    %c0_6 = arith.constant 0 : index
    %22 = vector.load %arg2[%c1, %c0_5, %c0_6] : memref<3x128x128xf32, #tpu.memory_space<vmem>>, vector<1x128x128xf32>
    %23 = vector.shape_cast %22 : vector<1x128x128xf32> to vector<128x128xf32>
    %cst = arith.constant dense<0.000000e+00> : vector<128x128xf32>
    %24 = tpu.matmul %21, %23, %cst {dimension_numbers = #tpu.dot_dimension_numbers<[1], [0], [0], [1], [0, 0, 1, 1], [], []>} : vector<128x128xf32>, vector<128x128xf32>, vector<128x128xf32> -> vector<128x128xf32>
    %cst_7 = arith.constant 0.000000e+00 : f32
    %25 = vector.broadcast %cst_7 : f32 to vector<1x128xf32>
    %26 = vector.extract_strided_slice %21 {offsets = [0, 0], sizes = [127, 128], strides = [1, 1]} : vector<128x128xf32> to vector<127x128xf32>
    %27 = tpu.concatenate %25, %26 in 0 : vector<1x128xf32>, vector<127x128xf32> -> vector<128x128xf32>
    %cst_8 = arith.constant 0.000000e+00 : f32
    %28 = vector.shape_cast %18 : vector<128x1xi1> to vector<128x1xi1>
    %29 = vector.broadcast %28 : vector<128x1xi1> to vector<128x128xi1>
    %30 = vector.broadcast %cst_8 : f32 to vector<128x128xf32>
    %31 = arith.select %29, %27, %30 : vector<128x128xi1>, vector<128x128xf32>
    %c0_9 = arith.constant 0 : index
    %c0_10 = arith.constant 0 : index
    %c0_11 = arith.constant 0 : index
    %32 = vector.load %arg2[%c0_9, %c0_10, %c0_11] : memref<3x128x128xf32, #tpu.memory_space<vmem>>, vector<1x128x128xf32>
    %33 = vector.shape_cast %32 : vector<1x128x128xf32> to vector<128x128xf32>
    %cst_12 = arith.constant dense<0.000000e+00> : vector<128x128xf32>
    %34 = tpu.matmul %31, %33, %cst_12 {dimension_numbers = #tpu.dot_dimension_numbers<[1], [0], [0], [1], [0, 0, 1, 1], [], []>} : vector<128x128xf32>, vector<128x128xf32>, vector<128x128xf32> -> vector<128x128xf32>
    %35 = arith.addf %24, %34 : vector<128x128xf32>
    %36 = vector.extract_strided_slice %21 {offsets = [1, 0], sizes = [127, 128], strides = [1, 1]} : vector<128x128xf32> to vector<127x128xf32>
    %cst_13 = arith.constant 0.000000e+00 : f32
    %37 = vector.broadcast %cst_13 : f32 to vector<1x128xf32>
    %38 = tpu.concatenate %36, %37 in 0 : vector<127x128xf32>, vector<1x128xf32> -> vector<128x128xf32>
    %cst_14 = arith.constant 0.000000e+00 : f32
    %39 = vector.shape_cast %20 : vector<128x1xi1> to vector<128x1xi1>
    %40 = vector.broadcast %39 : vector<128x1xi1> to vector<128x128xi1>
    %41 = vector.broadcast %cst_14 : f32 to vector<128x128xf32>
    %42 = arith.select %40, %38, %41 : vector<128x128xi1>, vector<128x128xf32>
    %c2 = arith.constant 2 : index
    %c0_15 = arith.constant 0 : index
    %c0_16 = arith.constant 0 : index
    %43 = vector.load %arg2[%c2, %c0_15, %c0_16] : memref<3x128x128xf32, #tpu.memory_space<vmem>>, vector<1x128x128xf32>
    %44 = vector.shape_cast %43 : vector<1x128x128xf32> to vector<128x128xf32>
    %cst_17 = arith.constant dense<0.000000e+00> : vector<128x128xf32>
    %45 = tpu.matmul %42, %44, %cst_17 {dimension_numbers = #tpu.dot_dimension_numbers<[1], [0], [0], [1], [0, 0, 1, 1], [], []>} : vector<128x128xf32>, vector<128x128xf32>, vector<128x128xf32> -> vector<128x128xf32>
    %46 = arith.addf %35, %45 : vector<128x128xf32>
    %c0_18 = arith.constant 0 : index
    %c0_19 = arith.constant 0 : index
    %c0_20 = arith.constant 0 : index
    %47 = vector.load %arg4[%c0_18, %c0_19, %c0_20] : memref<2x1x128xf32, #tpu.memory_space<vmem>>, vector<1x1x128xf32>
    %48 = vector.shape_cast %47 : vector<1x1x128xf32> to vector<1x128xf32>
    %49 = vector.broadcast %48 : vector<1x128xf32> to vector<128x128xf32>
    %50 = arith.addf %46, %49 : vector<128x128xf32>
    %cst_21 = arith.constant 0.000000e+00 : f32
    %51 = vector.broadcast %cst_21 : f32 to vector<128x128xf32>
    %52 = arith.maximumf %50, %51 : vector<128x128xf32>
    %c1_22 = arith.constant 1 : index
    %c0_23 = arith.constant 0 : index
    %c0_24 = arith.constant 0 : index
    %53 = vector.load %arg3[%c1_22, %c0_23, %c0_24] : memref<3x128x128xf32, #tpu.memory_space<vmem>>, vector<1x128x128xf32>
    %54 = vector.shape_cast %53 : vector<1x128x128xf32> to vector<128x128xf32>
    %cst_25 = arith.constant dense<0.000000e+00> : vector<128x128xf32>
    %55 = tpu.matmul %52, %54, %cst_25 {dimension_numbers = #tpu.dot_dimension_numbers<[1], [0], [0], [1], [0, 0, 1, 1], [], []>} : vector<128x128xf32>, vector<128x128xf32>, vector<128x128xf32> -> vector<128x128xf32>
    %cst_26 = arith.constant 0.000000e+00 : f32
    %56 = vector.broadcast %cst_26 : f32 to vector<1x128xf32>
    %57 = vector.extract_strided_slice %52 {offsets = [0, 0], sizes = [127, 128], strides = [1, 1]} : vector<128x128xf32> to vector<127x128xf32>
    %58 = tpu.concatenate %56, %57 in 0 : vector<1x128xf32>, vector<127x128xf32> -> vector<128x128xf32>
    %cst_27 = arith.constant 0.000000e+00 : f32
    %59 = vector.shape_cast %18 : vector<128x1xi1> to vector<128x1xi1>
    %60 = vector.broadcast %59 : vector<128x1xi1> to vector<128x128xi1>
    %61 = vector.broadcast %cst_27 : f32 to vector<128x128xf32>
    %62 = arith.select %60, %58, %61 : vector<128x128xi1>, vector<128x128xf32>
    %c0_28 = arith.constant 0 : index
    %c0_29 = arith.constant 0 : index
    %c0_30 = arith.constant 0 : index
    %63 = vector.load %arg3[%c0_28, %c0_29, %c0_30] : memref<3x128x128xf32, #tpu.memory_space<vmem>>, vector<1x128x128xf32>
    %64 = vector.shape_cast %63 : vector<1x128x128xf32> to vector<128x128xf32>
    %cst_31 = arith.constant dense<0.000000e+00> : vector<128x128xf32>
    %65 = tpu.matmul %62, %64, %cst_31 {dimension_numbers = #tpu.dot_dimension_numbers<[1], [0], [0], [1], [0, 0, 1, 1], [], []>} : vector<128x128xf32>, vector<128x128xf32>, vector<128x128xf32> -> vector<128x128xf32>
    %66 = arith.addf %55, %65 : vector<128x128xf32>
    %67 = vector.extract_strided_slice %52 {offsets = [1, 0], sizes = [127, 128], strides = [1, 1]} : vector<128x128xf32> to vector<127x128xf32>
    %cst_32 = arith.constant 0.000000e+00 : f32
    %68 = vector.broadcast %cst_32 : f32 to vector<1x128xf32>
    %69 = tpu.concatenate %67, %68 in 0 : vector<127x128xf32>, vector<1x128xf32> -> vector<128x128xf32>
    %cst_33 = arith.constant 0.000000e+00 : f32
    %70 = vector.shape_cast %20 : vector<128x1xi1> to vector<128x1xi1>
    %71 = vector.broadcast %70 : vector<128x1xi1> to vector<128x128xi1>
    %72 = vector.broadcast %cst_33 : f32 to vector<128x128xf32>
    %73 = arith.select %71, %69, %72 : vector<128x128xi1>, vector<128x128xf32>
    %c2_34 = arith.constant 2 : index
    %c0_35 = arith.constant 0 : index
    %c0_36 = arith.constant 0 : index
    %74 = vector.load %arg3[%c2_34, %c0_35, %c0_36] : memref<3x128x128xf32, #tpu.memory_space<vmem>>, vector<1x128x128xf32>
    %75 = vector.shape_cast %74 : vector<1x128x128xf32> to vector<128x128xf32>
    %cst_37 = arith.constant dense<0.000000e+00> : vector<128x128xf32>
    %76 = tpu.matmul %73, %75, %cst_37 {dimension_numbers = #tpu.dot_dimension_numbers<[1], [0], [0], [1], [0, 0, 1, 1], [], []>} : vector<128x128xf32>, vector<128x128xf32>, vector<128x128xf32> -> vector<128x128xf32>
    %77 = arith.addf %66, %76 : vector<128x128xf32>
    %c1_38 = arith.constant 1 : index
    %c0_39 = arith.constant 0 : index
    %c0_40 = arith.constant 0 : index
    %78 = vector.load %arg4[%c1_38, %c0_39, %c0_40] : memref<2x1x128xf32, #tpu.memory_space<vmem>>, vector<1x1x128xf32>
    %79 = vector.shape_cast %78 : vector<1x1x128xf32> to vector<1x128xf32>
    %80 = vector.broadcast %79 : vector<1x128xf32> to vector<128x128xf32>
    %81 = arith.addf %77, %80 : vector<128x128xf32>
    %82 = arith.addf %81, %21 : vector<128x128xf32>
    %cst_41 = arith.constant 0.000000e+00 : f32
    %83 = vector.broadcast %cst_41 : f32 to vector<128x128xf32>
    %84 = arith.maximumf %82, %83 : vector<128x128xf32>
    %c0_42 = arith.constant 0 : index
    %c0_43 = arith.constant 0 : index
    %85 = vector.load %arg5[%c0_42, %c0_43] : memref<128x128xf32, #tpu.memory_space<vmem>>, vector<128x128xf32>
    tpu.vector_store %arg5[%c0_42, %c0_43], %84 {strides = array<i32>} : memref<128x128xf32, #tpu.memory_space<vmem>>, vector<128x128xf32>,
    return
  }
  func.func @transform_0(%arg0: i32) -> (i32, i32) {
    %c0_i32 = arith.constant 0 : i32
    %c0_i32_0 = arith.constant 0 : i32
    return %arg0, %c0_i32 : i32, i32
  }
  func.func @transform_1(%arg0: i32) -> (i32, i32, i32) {
    %c0_i32 = arith.constant 0 : i32
    %c0_i32_0 = arith.constant 0 : i32
    %c0_i32_1 = arith.constant 0 : i32
    %c0_i32_2 = arith.constant 0 : i32
    return %c0_i32, %c0_i32_0, %c0_i32_1 : i32, i32, i32
  }
  func.func @transform_2(%arg0: i32) -> (i32, i32, i32) {
    %c0_i32 = arith.constant 0 : i32
    %c0_i32_0 = arith.constant 0 : i32
    %c0_i32_1 = arith.constant 0 : i32
    %c0_i32_2 = arith.constant 0 : i32
    return %c0_i32, %c0_i32_0, %c0_i32_1 : i32, i32, i32
  }
  func.func @transform_3(%arg0: i32) -> (i32, i32, i32) {
    %c0_i32 = arith.constant 0 : i32
    %c0_i32_0 = arith.constant 0 : i32
    %c0_i32_1 = arith.constant 0 : i32
    %c0_i32_2 = arith.constant 0 : i32
    return %c0_i32, %c0_i32_0, %c0_i32_1 : i32, i32, i32
  }
  func.func @transform_4(%arg0: i32) -> (i32, i32) {
    %c0_i32 = arith.constant 0 : i32
    %c0_i32_0 = arith.constant 0 : i32
    return %arg0, %c0_i32 : i32, i32
  }
}

</mosaic_0001>

<llo_original>
// kernel: tile.13
$region0: #{tile.13}
  #allocation0 [shape = 's32[1]{0}', space=sflag, size = 0x4, scoped, tag = 'scoped memory for tile.13']
  %s0 = inlined_call_operand.vmem [shape: f32[8], index: 0, kind: input, shape index: {}]
  %s1 = inlined_call_operand.vmem [shape: f32[16,8], index: 1, kind: output, shape index: {}]
  // Predicated region
  $region2: #{tile.13} parent=0 // pred_check
    _
  $region3: #{tile.13} parent=0 // pred_check_branch
    %3 = sbr.rel (0) target = $region5
  $region4: #{tile.13} parent=0 // pred_region
    _
  $region5: #{tile.13} parent=0 // pred_fallthru
    _
  %v4 = vld [vmem:[%s0] ss:$0 sm:$0xff]
  %5 = vst [vmem:[%s1] sm:$0xff] %v4
  %s6 = scalar_lea.vmem %s1, 8
  %7 = vst [vmem:[%s6] sm:$0xff] %v4

// kernel: tile.18
$region0: #{tile.18}
  %s0 = inlined_call_operand.vmem [shape: f32[16,8], index: 0, kind: input, shape index: {}]
  %s1 = inlined_call_operand.vmem [shape: f32[1,128], index: 1, kind: output, shape index: {}]
  $region1: #{tile.18} parent=0
    #allocation0 [shape = 'u8[4096]{0}', space=vmem, size = 0x1000, scoped, tag = 'scoped mem for output reshape']
    %v2 = vld [vmem:[%s0] sm:$0x1]
    %vm3 = vcmask 64512
    %4 = vst.msk [vmem:[#allocation0] sm:$0x1] %vm3, %v2
    %s5 = scalar_lea.vmem %s0, 15
    %v6 = vld [vmem:[%s5] sm:$0x1]
    %7 = vrot.lane.b32.xlu0 %v6, 120
    %v8 = vpop.permute.xlu0 %7
    %vm9 = vcmask 1048512
    %10 = vst.msk [vmem:[#allocation0] sm:$0x1] %vm9, %v8
    %s11 = scalar_lea.vmem %s0, 14
    %v12 = vld [vmem:[%s11] sm:$0x1]
    %13 = vrot.lane.b32.xlu0 %v12, 112
    %v14 = vpop.permute.xlu0 %13
    %vm15 = vcmask 982912
    %16 = vst.msk [vmem:[#allocation0] sm:$0x1] %vm15, %v14
    %s17 = scalar_lea.vmem %s0, 13
    %v18 = vld [vmem:[%s17] sm:$0x1]
    %19 = vrot.lane.b32.xlu0 %v18, 104
    %v20 = vpop.permute.xlu0 %19
    %vm21 = vcmask 917312
    %22 = vst.msk [vmem:[#allocation0] sm:$0x1] %vm21, %v20
    %s23 = scalar_lea.vmem %s0, 12
    %v24 = vld [vmem:[%s23] sm:$0x1]
    %25 = vrot.lane.b32.xlu0 %v24, 96
    %v26 = vpop.permute.xlu0 %25
    %vm27 = vcmask 851712
    %28 = vst.msk [vmem:[#allocation0] sm:$0x1] %vm27, %v26
    %s29 = scalar_lea.vmem %s0, 11
    %v30 = vld [vmem:[%s29] sm:$0x1]
    %31 = vrot.lane.b32.xlu0 %v30, 88
    %v32 = vpop.permute.xlu0 %31
    %vm33 = vcmask 786112
    %34 = vst.msk [vmem:[#allocation0] sm:$0x1] %vm33, %v32
    %s35 = scalar_lea.vmem %s0, 10
    %v36 = vld [vmem:[%s35] sm:$0x1]
    %37 = vrot.lane.b32.xlu0 %v36, 80
    %v38 = vpop.permute.xlu0 %37
    %vm39 = vcmask 720512
    %40 = vst.msk [vmem:[#allocation0] sm:$0x1] %vm39, %v38
    %s41 = scalar_lea.vmem %s0, 9
    %v42 = vld [vmem:[%s41] sm:$0x1]
    %43 = vrot.lane.b32.xlu0 %v42, 72
    %v44 = vpop.permute.xlu0 %43
    %vm45 = vcmask 654912
    %46 = vst.msk [vmem:[#allocation0] sm:$0x1] %vm45, %v44
    %s47 = scalar_lea.vmem %s0, 8
    %v48 = vld [vmem:[%s47] sm:$0x1]
    %49 = vrot.lane.b32.xlu0 %v48, 64
    %v50 = vpop.permute.xlu0 %49
    %vm51 = vcmask 589312
    %52 = vst.msk [vmem:[#allocation0] sm:$0x1] %vm51, %v50
    %s53 = scalar_lea.vmem %s0, 7
    %v54 = vld [vmem:[%s53] sm:$0x1]
    %55 = vrot.lane.b32.xlu0 %v54, 56
    %v56 = vpop.permute.xlu0 %55
    %vm57 = vcmask 523712
    %58 = vst.msk [vmem:[#allocation0] sm:$0x1] %vm57, %v56
    %s59 = scalar_lea.vmem %s0, 6
    %v60 = vld [vmem:[%s59] sm:$0x1]
    %61 = vrot.lane.b32.xlu0 %v60, 48
    %v62 = vpop.permute.xlu0 %61
    %vm63 = vcmask 458112
    %64 = vst.msk [vmem:[#allocation0] sm:$0x1] %vm63, %v62
    %s65 = scalar_lea.vmem %s0, 5
    %v66 = vld [vmem:[%s65] sm:$0x1]
    %67 = vrot.lane.b32.xlu0 %v66, 40
    %v68 = vpop.permute.xlu0 %67
    %vm69 = vcmask 392512
    %70 = vst.msk [vmem:[#allocation0] sm:$0x1] %vm69, %v68
    %s71 = scalar_lea.vmem %s0, 4
    %v72 = vld [vmem:[%s71] sm:$0x1]
    %73 = vrot.lane.b32.xlu0 %v72, 32
    %v74 = vpop.permute.xlu0 %73
    %vm75 = vcmask 326912
    %76 = vst.msk [vmem:[#allocation0] sm:$0x1] %vm75, %v74
    %s77 = scalar_lea.vmem %s0, 3
    %v78 = vld [vmem:[%s77] sm:$0x1]
    %79 = vrot.lane.b32.xlu0 %v78, 24
    %v80 = vpop.permute.xlu0 %79
    %vm81 = vcmask 261312
    %82 = vst.msk [vmem:[#allocation0] sm:$0x1] %vm81, %v80
    %s83 = scalar_lea.vmem %s0, 2
    %v84 = vld [vmem:[%s83] sm:$0x1]
    %85 = vrot.lane.b32.xlu0 %v84, 16
    %v86 = vpop.permute.xlu0 %85
    %vm87 = vcmask 195712
    %88 = vst.msk [vmem:[#allocation0] sm:$0x1] %vm87, %v86
    %s89 = scalar_lea.vmem %s0, 1
    %v90 = vld [vmem:[%s89] sm:$0x1]
    %91 = vrot.lane.b32.xlu0 %v90, 8
    %v92 = vpop.permute.xlu0 %91
    %vm93 = vcmask 130112
    %94 = vst.msk [vmem:[#allocation0] sm:$0x1] %vm93, %v92
    %s96 = sshll.u32 1, 1
    %s97 = ssub.s32 %s96, 1
    %v99 = vld [vmem:[#allocation0] sm:%s97]
    %s100 = sshll.u32 1, 1
    %s101 = ssub.s32 %s100, 1
    %102 = vst [vmem:[%s1] sm:%s101] %v99

// kernel: resblock_forward.1
$region0: #{resblock_forward.1}
  #allocation0 [shape = 'u32[]', space=smem, size = 0x4, offset = 0x4, fixed_abs, tag = 'smem constant byte address 0x4 - core index']
  #allocation1 [shape = 'u32[144,128]{1,0:T(1,128)}', space=vmem, size = 0x12000, scoped, tag = 'internal scratch']
  %s0 = inlined_call_operand.vmem [shape: f32[256,128], index: 0, kind: input, shape index: {}]
  %s1 = inlined_call_operand.vmem [shape: f32[3,128,128], index: 1, kind: input, shape index: {}]
  %s2 = inlined_call_operand.vmem [shape: f32[3,128,128], index: 2, kind: input, shape index: {}]
  %s3 = inlined_call_operand.vmem [shape: f32[2,1,128], index: 3, kind: input, shape index: {}]
  %s4 = inlined_call_operand.vmem [shape: f32[256,128], index: 4, kind: output, shape index: {}]
  %s5 = sld [smem:[#allocation0]]
  $region49: #{resblock_forward.1} parent=0
    _
  %s7 = ssub.s32 1, %s5
  %s8 = scalar_select 0, %s7, %s5
  loop: start=0, step=1, limit=4
  $region2: #{resblock_forward.1} parent=0 // loop_pre_header
    _
  $region3: #{resblock_forward.1} parent=0 // loop_header
    %s10 = sphi 0, %s14
    %p11 = scmp.ge.s32.totalorder %s10, 4
    %s20 = sphi 0, %s22
    %s23 = sphi 0, %s20
    %s24 = sphi 0, %s23
    %s40 = sphi 0, %s24
    %s44 = sphi 0, %s44
    %s46 = sphi 0, %s44
    %s47 = sphi 0, %s46
    %s61 = sphi 0, %s47
    %s65 = sphi 0, %s65
    %s67 = sphi 0, %s65
    %s68 = sphi 0, %s67
    %s82 = sphi 0, %s68
    %s86 = sphi 0, %s86
    %s88 = sphi 0, %s86
    %s89 = sphi 0, %s88
    %s103 = sphi 0, %s89
    %s109 = sphi 0, %s111
    %s112 = sphi 0, %s109
    %s113 = sphi 0, %s112
    %s129 = sphi 0, %s113
  $region4: #{resblock_forward.1} parent=0 // loop_header_branch
    %13 = sbr.rel (%p11) target = $region8
  $region5: #{resblock_forward.1} parent=0 // loop_body
    %s15 = ssub.s32 %s10, 1
    %s16 = ssub.s32 %s10, 2
    %s17 = sadd.s32 %s10, 1
    %s18 = ssub.s32 %s10, %s17
    %p19 = scmp.eq.s32.totalorder %s18, 0
    %s21 = sadd.s32 %s20, 1
    %s22 = scalar_select %p19, %s20, %s21
    %p25 = pneg %p19
    %p26 = scmp.eq.s32.totalorder %s10, 1
    %p27 = por %p25, %p26
    %p28 = scmp.ne.s32.totalorder %s20, %s23
    %p29 = scmp.eq.s32.totalorder %s10, 0
    %p30 = por %p28, %p29
    %p31 = scmp.ne.s32.totalorder %s20, %s23
    %p32 = scmp.eq.s32.totalorder %s15, 1
    %p33 = por %p31, %p32
    %p34 = scmp.ne.s32.totalorder %s23, %s24
    %p35 = scmp.eq.s32.totalorder %s15, 0
    %p36 = por %p34, %p35
    %p37 = scmp.ne.s32.totalorder %s23, %s24
    %p38 = scmp.eq.s32.totalorder %s16, 1
    %p39 = por %p37, %p38
    %p41 = scmp.ne.s32.totalorder %s24, %s40
    %p42 = scmp.eq.s32.totalorder %s16, 0
    %p43 = por %p41, %p42
    %s45 = sadd.s32 %s44, 1
    %p48 = scmp.eq.s32.totalorder %s10, 1
    %p49 = scmp.ne.s32.totalorder %s44, %s46
    %p50 = scmp.eq.s32.totalorder %s10, 0
    %p51 = por %p49, %p50
    %p52 = scmp.ne.s32.totalorder %s44, %s46
    %p53 = scmp.eq.s32.totalorder %s15, 1
    %p54 = por %p52, %p53
    %p55 = scmp.ne.s32.totalorder %s46, %s47
    %p56 = scmp.eq.s32.totalorder %s15, 0
    %p57 = por %p55, %p56
    %p58 = scmp.ne.s32.totalorder %s46, %s47
    %p59 = scmp.eq.s32.totalorder %s16, 1
    %p60 = por %p58, %p59
    %p62 = scmp.ne.s32.totalorder %s47, %s61
    %p63 = scmp.eq.s32.totalorder %s16, 0
    %p64 = por %p62, %p63
    %s66 = sadd.s32 %s65, 1
    %p69 = scmp.eq.s32.totalorder %s10, 1
    %p70 = scmp.ne.s32.totalorder %s65, %s67
    %p71 = scmp.eq.s32.totalorder %s10, 0
    %p72 = por %p70, %p71
    %p73 = scmp.ne.s32.totalorder %s65, %s67
    %p74 = scmp.eq.s32.totalorder %s15, 1
    %p75 = por %p73, %p74
    %p76 = scmp.ne.s32.totalorder %s67, %s68
    %p77 = scmp.eq.s32.totalorder %s15, 0
    %p78 = por %p76, %p77
    %p79 = scmp.ne.s32.totalorder %s67, %s68
    %p80 = scmp.eq.s32.totalorder %s16, 1
    %p81 = por %p79, %p80
    %p83 = scmp.ne.s32.totalorder %s68, %s82
    %p84 = scmp.eq.s32.totalorder %s16, 0
    %p85 = por %p83, %p84
    %s87 = sadd.s32 %s86, 1
    %p90 = scmp.eq.s32.totalorder %s10, 1
    %p91 = scmp.ne.s32.totalorder %s86, %s88
    %p92 = scmp.eq.s32.totalorder %s10, 0
    %p93 = por %p91, %p92
    %p94 = scmp.ne.s32.totalorder %s86, %s88
    %p95 = scmp.eq.s32.totalorder %s15, 1
    %p96 = por %p94, %p95
    %p97 = scmp.ne.s32.totalorder %s88, %s89
    %p98 = scmp.eq.s32.totalorder %s15, 0
    %p99 = por %p97, %p98
    %p100 = scmp.ne.s32.totalorder %s88, %s89
    %p101 = scmp.eq.s32.totalorder %s16, 1
    %p102 = por %p100, %p101
    %p104 = scmp.ne.s32.totalorder %s89, %s103
    %p105 = scmp.eq.s32.totalorder %s16, 0
    %p106 = por %p104, %p105
    %s107 = ssub.s32 %s10, %s17
    %p108 = scmp.eq.s32.totalorder %s107, 0
    %s110 = sadd.s32 %s109, 1
    %s111 = scalar_select %p108, %s109, %s110
    %p114 = pneg %p108
    %p115 = scmp.eq.s32.totalorder %s10, 1
    %p116 = por %p114, %p115
    %p117 = scmp.ne.s32.totalorder %s109, %s112
    %p118 = scmp.eq.s32.totalorder %s10, 0
    %p119 = por %p117, %p118
    %p120 = scmp.ne.s32.totalorder %s109, %s112
    %p121 = scmp.eq.s32.totalorder %s15, 1
    %p122 = por %p120, %p121
    %p123 = scmp.ne.s32.totalorder %s112, %s113
    %p124 = scmp.eq.s32.totalorder %s15, 0
    %p125 = por %p123, %p124
    %p126 = scmp.ne.s32.totalorder %s112, %s113
    %p127 = scmp.eq.s32.totalorder %s16, 1
    %p128 = por %p126, %p127
    %p130 = scmp.ne.s32.totalorder %s113, %s129
    %p131 = scmp.eq.s32.totalorder %s16, 0
    %p132 = por %p130, %p131
    %p133 = scmp.le.s32.totalorder 1, %s10
    %p134 = scmp.lt.s32.totalorder %s10, 3
    %p135 = pnand %p133, %p134
    %p136 = pneg %p135
    // Predicated region
    $region9: #{resblock_forward.1} parent=5 // pred_check
      _
    $region10: #{resblock_forward.1} parent=5 // pred_check_branch
      %138 = sbr.rel (%p135) target = $region12
    $region11: #{resblock_forward.1} parent=5 // pred_region
      %s139 = ssub.s32 %s10, 1
      // Predicated region
      $region13: #{resblock_forward.1} parent=11 // pred_check
        %p140 = pneg %p57
      $region14: #{resblock_forward.1} parent=11 // pred_check_branch
        %142 = sbr.rel (%p140) target = $region16
      $region15: #{resblock_forward.1} parent=11 // pred_region
        _
      $region16: #{resblock_forward.1} parent=11 // pred_fallthru
        _
      // Predicated region
      $region17: #{resblock_forward.1} parent=11 // pred_check
        %p143 = pneg %p78
      $region18: #{resblock_forward.1} parent=11 // pred_check_branch
        %145 = sbr.rel (%p143) target = $region20
      $region19: #{resblock_forward.1} parent=11 // pred_region
        _
      $region20: #{resblock_forward.1} parent=11 // pred_fallthru
        _
      // Predicated region
      $region21: #{resblock_forward.1} parent=11 // pred_check
        %p146 = pneg %p99
      $region22: #{resblock_forward.1} parent=11 // pred_check_branch
        %148 = sbr.rel (%p146) target = $region24
      $region23: #{resblock_forward.1} parent=11 // pred_region
        _
      $region24: #{resblock_forward.1} parent=11 // pred_fallthru
        _
    $region12: #{resblock_forward.1} parent=5 // pred_fallthru
      _
    %p149 = scmp.lt.s32.totalorder %s10, 2
    // Predicated region
    $region25: #{resblock_forward.1} parent=5 // pred_check
      %p150 = pneg %p149
    $region26: #{resblock_forward.1} parent=5 // pred_check_branch
      %152 = sbr.rel (%p150) target = $region28
    $region27: #{resblock_forward.1} parent=5 // pred_region
      // Predicated region
      $region29: #{resblock_forward.1} parent=27 // pred_check
        %p153 = pneg %p30
      $region30: #{resblock_forward.1} parent=27 // pred_check_branch
        %155 = sbr.rel (%p153) target = $region32
      $region31: #{resblock_forward.1} parent=27 // pred_region
        %s156 = smul.u32 16, %s10
        %p157 = scmp.lt.s32.totalorder %s156, 31
        %s158 = scalar_select %p157, %s156, 31
        %s159 = smul.addr %s158, 8
        %s160 = scalar_lea.vmem %s0, %s159
        %s161 = smul.u32 16, %s10
      $region32: #{resblock_forward.1} parent=27 // pred_fallthru
        _
    $region28: #{resblock_forward.1} parent=5 // pred_fallthru
      _
    %p162 = scmp.le.s32.totalorder 1, %s10
    %p163 = scmp.lt.s32.totalorder %s10, 3
    %p164 = pnand %p162, %p163
    %p165 = pneg %p164
    // Predicated region
    $region33: #{resblock_forward.1} parent=5 // pred_check
      _
    $region34: #{resblock_forward.1} parent=5 // pred_check_branch
      %167 = sbr.rel (%p164) target = $region36
    $region35: #{resblock_forward.1} parent=5 // pred_region
      %s168 = ssub.s32 %s10, 1
      %s169 = smul.u32 16, %s15
      %p170 = scmp.lt.s32.totalorder %s169, 31
      %s171 = scalar_select %p170, %s169, 31
      %s172 = smul.addr %s171, 8
      %s173 = scalar_lea.vmem %s0, %s172
      %p174 = pneg %p36
      %p175 = pneg %p33
      %p176 = pneg %p57
      %p177 = pneg %p54
      %p178 = pneg %p78
      %p179 = pneg %p75
      %p180 = pneg %p99
      %p181 = pneg %p96
      %p182 = pneg %p125
      %p183 = pneg %p122
      %s184 = smul.u32 16, %s15
      %p185 = scmp.lt.s32.totalorder %s184, 31
      %s186 = scalar_select %p185, %s184, 31
      %s187 = smul.addr %s186, 8
      %s188 = scalar_lea.vmem %s4, %s187
      %s189 = smul.u32 16, %s15
      %p190 = scmp.lt.s32.totalorder %s189, 31
      %s191 = scalar_select %p190, %s189, 31
      %s192 = smul.addr %s191, 8
      %s193 = scalar_lea.vmem %s0, %s192
      %s194 = smul.u32 16, %s15
      %s195 = smul.u32 16, %s15
      %p196 = scmp.lt.s32.totalorder %s195, 31
      %s197 = scalar_select %p196, %s195, 31
      %s198 = smul.addr %s197, 8
      %s199 = scalar_lea.vmem %s4, %s198
      %s200 = smul.u32 16, %s15
      %v201 = vlaneseq
      %v202 = vshrl.u32 %v201, 7
      %v203 = vadd.s32 %v202, 8
      %v204 = vadd.s32 %v202, 16
      %v205 = vadd.s32 %v202, 24
      %v206 = vadd.s32 %v202, 32
      %v207 = vadd.s32 %v202, 40
      %v208 = vadd.s32 %v202, 48
      %v209 = vadd.s32 %v202, 56
      %v210 = vadd.s32 %v202, 64
      %v211 = vadd.s32 %v202, 72
      %v212 = vadd.s32 %v202, 80
      %v213 = vadd.s32 %v202, 88
      %v214 = vadd.s32 %v202, 96
      %v215 = vadd.s32 %v202, 104
      %v216 = vadd.s32 %v202, 112
      %v217 = vadd.s32 %v202, 120
      %vm218 = vcmp.lt.s32.totalorder %v202, 0
      %v219 = vsub.s32 0, %v202
      %v220 = vsel %vm218, %v219, %v202
      %v221 = vshrl.u32 %v220, 4
      %v222 = vand.u32 %v220, 15
      %v223 = vsub.s32 0, %v222
      %v224 = vsel %vm218, %v223, %v222
      %vm225 = vcmp.lt.s32.totalorder %v203, 0
      %v226 = vsub.s32 0, %v203
      %v227 = vsel %vm225, %v226, %v203
      %v228 = vshrl.u32 %v227, 4
      %v229 = vand.u32 %v227, 15
      %v230 = vsub.s32 0, %v229
      %v231 = vsel %vm225, %v230, %v229
      %vm232 = vcmp.lt.s32.totalorder %v204, 0
      %v233 = vsub.s32 0, %v204
      %v234 = vsel %vm232, %v233, %v204
      %v235 = vshrl.u32 %v234, 4
      %v236 = vand.u32 %v234, 15
      %v237 = vsub.s32 0, %v236
      %v238 = vsel %vm232, %v237, %v236
      %vm239 = vcmp.lt.s32.totalorder %v205, 0
      %v240 = vsub.s32 0, %v205
      %v241 = vsel %vm239, %v240, %v205
      %v242 = vshrl.u32 %v241, 4
      %v243 = vand.u32 %v241, 15
      %v244 = vsub.s32 0, %v243
      %v245 = vsel %vm239, %v244, %v243
      %vm246 = vcmp.lt.s32.totalorder %v206, 0
      %v247 = vsub.s32 0, %v206
      %v248 = vsel %vm246, %v247, %v206
      %v249 = vshrl.u32 %v248, 4
      %v250 = vand.u32 %v248, 15
      %v251 = vsub.s32 0, %v250
      %v252 = vsel %vm246, %v251, %v250
      %vm253 = vcmp.lt.s32.totalorder %v207, 0
      %v254 = vsub.s32 0, %v207
      %v255 = vsel %vm253, %v254, %v207
      %v256 = vshrl.u32 %v255, 4
      %v257 = vand.u32 %v255, 15
      %v258 = vsub.s32 0, %v257
      %v259 = vsel %vm253, %v258, %v257
      %vm260 = vcmp.lt.s32.totalorder %v208, 0
      %v261 = vsub.s32 0, %v208
      %v262 = vsel %vm260, %v261, %v208
      %v263 = vshrl.u32 %v262, 4
      %v264 = vand.u32 %v262, 15
      %v265 = vsub.s32 0, %v264
      %v266 = vsel %vm260, %v265, %v264
      %vm267 = vcmp.lt.s32.totalorder %v209, 0
      %v268 = vsub.s32 0, %v209
      %v269 = vsel %vm267, %v268, %v209
      %v270 = vshrl.u32 %v269, 4
      %v271 = vand.u32 %v269, 15
      %v272 = vsub.s32 0, %v271
      %v273 = vsel %vm267, %v272, %v271
      %vm274 = vcmp.lt.s32.totalorder %v210, 0
      %v275 = vsub.s32 0, %v210
      %v276 = vsel %vm274, %v275, %v210
      %v277 = vshrl.u32 %v276, 4
      %v278 = vand.u32 %v276, 15
      %v279 = vsub.s32 0, %v278
      %v280 = vsel %vm274, %v279, %v278
      %vm281 = vcmp.lt.s32.totalorder %v211, 0
      %v282 = vsub.s32 0, %v211
      %v283 = vsel %vm281, %v282, %v211
      %v284 = vshrl.u32 %v283, 4
      %v285 = vand.u32 %v283, 15
      %v286 = vsub.s32 0, %v285
      %v287 = vsel %vm281, %v286, %v285
      %vm288 = vcmp.lt.s32.totalorder %v212, 0
      %v289 = vsub.s32 0, %v212
      %v290 = vsel %vm288, %v289, %v212
      %v291 = vshrl.u32 %v290, 4
      %v292 = vand.u32 %v290, 15
      %v293 = vsub.s32 0, %v292
      %v294 = vsel %vm288, %v293, %v292
      %vm295 = vcmp.lt.s32.totalorder %v213, 0
      %v296 = vsub.s32 0, %v213
      %v297 = vsel %vm295, %v296, %v213
      %v298 = vshrl.u32 %v297, 4
      %v299 = vand.u32 %v297, 15
      %v300 = vsub.s32 0, %v299
      %v301 = vsel %vm295, %v300, %v299
      %vm302 = vcmp.lt.s32.totalorder %v214, 0
      %v303 = vsub.s32 0, %v214
      %v304 = vsel %vm302, %v303, %v214
      %v305 = vshrl.u32 %v304, 4
      %v306 = vand.u32 %v304, 15
      %v307 = vsub.s32 0, %v306
      %v308 = vsel %vm302, %v307, %v306
      %vm309 = vcmp.lt.s32.totalorder %v215, 0
      %v310 = vsub.s32 0, %v215
      %v311 = vsel %vm309, %v310, %v215
      %v312 = vshrl.u32 %v311, 4
      %v313 = vand.u32 %v311, 15
      %v314 = vsub.s32 0, %v313
      %v315 = vsel %vm309, %v314, %v313
      %vm316 = vcmp.lt.s32.totalorder %v216, 0
      %v317 = vsub.s32 0, %v216
      %v318 = vsel %vm316, %v317, %v216
      %v319 = vshrl.u32 %v318, 4
      %v320 = vand.u32 %v318, 15
      %v321 = vsub.s32 0, %v320
      %v322 = vsel %vm316, %v321, %v320
      %vm323 = vcmp.lt.s32.totalorder %v217, 0
      %v324 = vsub.s32 0, %v217
      %v325 = vsel %vm323, %v324, %v217
      %v326 = vshrl.u32 %v325, 4
      %v327 = vand.u32 %v325, 15
      %v328 = vsub.s32 0, %v327
      %v329 = vsel %vm323, %v328, %v327
      %vm330 = vcmp.ne.s32.totalorder %v224, 0
      %vm331 = vcmp.ne.s32.totalorder %v231, 0
      %vm332 = vcmp.ne.s32.totalorder %v238, 0
      %vm333 = vcmp.ne.s32.totalorder %v245, 0
      %vm334 = vcmp.ne.s32.totalorder %v252, 0
      %vm335 = vcmp.ne.s32.totalorder %v259, 0
      %vm336 = vcmp.ne.s32.totalorder %v266, 0
      %vm337 = vcmp.ne.s32.totalorder %v273, 0
      %vm338 = vcmp.ne.s32.totalorder %v280, 0
      %vm339 = vcmp.ne.s32.totalorder %v287, 0
      %vm340 = vcmp.ne.s32.totalorder %v294, 0
      %vm341 = vcmp.ne.s32.totalorder %v301, 0
      %vm342 = vcmp.ne.s32.totalorder %v308, 0
      %vm343 = vcmp.ne.s32.totalorder %v315, 0
      %vm344 = vcmp.ne.s32.totalorder %v322, 0
      %vm345 = vcmp.ne.s32.totalorder %v329, 0
      %vm346 = vcmp.lt.s32.totalorder %v224, 0
      %vm347 = vcmp.lt.s32.totalorder %v231, 0
      %vm348 = vcmp.lt.s32.totalorder %v238, 0
      %vm349 = vcmp.lt.s32.totalorder %v245, 0
      %vm350 = vcmp.lt.s32.totalorder %v252, 0
      %vm351 = vcmp.lt.s32.totalorder %v259, 0
      %vm352 = vcmp.lt.s32.totalorder %v266, 0
      %vm353 = vcmp.lt.s32.totalorder %v273, 0
      %vm354 = vcmp.lt.s32.totalorder %v280, 0
      %vm355 = vcmp.lt.s32.totalorder %v287, 0
      %vm356 = vcmp.lt.s32.totalorder %v294, 0
      %vm357 = vcmp.lt.s32.totalorder %v301, 0
      %vm358 = vcmp.lt.s32.totalorder %v308, 0
      %vm359 = vcmp.lt.s32.totalorder %v315, 0
      %vm360 = vcmp.lt.s32.totalorder %v322, 0
      %vm361 = vcmp.lt.s32.totalorder %v329, 0
      %vm362 = vmand %vm346, %vm330
      %vm363 = vmand %vm347, %vm331
      %vm364 = vmand %vm348, %vm332
      %vm365 = vmand %vm349, %vm333
      %vm366 = vmand %vm350, %vm334
      %vm367 = vmand %vm351, %vm335
      %vm368 = vmand %vm352, %vm336
      %vm369 = vmand %vm353, %vm337
      %vm370 = vmand %vm354, %vm338
      %vm371 = vmand %vm355, %vm339
      %vm372 = vmand %vm356, %vm340
      %vm373 = vmand %vm357, %vm341
      %vm374 = vmand %vm358, %vm342
      %vm375 = vmand %vm359, %vm343
      %vm376 = vmand %vm360, %vm344
      %vm377 = vmand %vm361, %vm345
      %v378 = vadd.s32 %v224, 16
      %v379 = vadd.s32 %v231, 16
      %v380 = vadd.s32 %v238, 16
      %v381 = vadd.s32 %v245, 16
      %v382 = vadd.s32 %v252, 16
      %v383 = vadd.s32 %v259, 16
      %v384 = vadd.s32 %v266, 16
      %v385 = vadd.s32 %v273, 16
      %v386 = vadd.s32 %v280, 16
      %v387 = vadd.s32 %v287, 16
      %v388 = vadd.s32 %v294, 16
      %v389 = vadd.s32 %v301, 16
      %v390 = vadd.s32 %v308, 16
      %v391 = vadd.s32 %v315, 16
      %v392 = vadd.s32 %v322, 16
      %v393 = vadd.s32 %v329, 16
      %v394 = vsel %vm362, %v378, %v224
      %v395 = vsel %vm363, %v379, %v231
      %v396 = vsel %vm364, %v380, %v238
      %v397 = vsel %vm365, %v381, %v245
      %v398 = vsel %vm366, %v382, %v252
      %v399 = vsel %vm367, %v383, %v259
      %v400 = vsel %vm368, %v384, %v266
      %v401 = vsel %vm369, %v385, %v273
      %v402 = vsel %vm370, %v386, %v280
      %v403 = vsel %vm371, %v387, %v287
      %v404 = vsel %vm372, %v388, %v294
      %v405 = vsel %vm373, %v389, %v301
      %v406 = vsel %vm374, %v390, %v308
      %v407 = vsel %vm375, %v391, %v315
      %v408 = vsel %vm376, %v392, %v322
      %v409 = vsel %vm377, %v393, %v329
      %vm410 = vcmp.gt.s32.totalorder %v394, 0
      %vm411 = vcmp.gt.s32.totalorder %v395, 0
      %vm412 = vcmp.gt.s32.totalorder %v396, 0
      %vm413 = vcmp.gt.s32.totalorder %v397, 0
      %vm414 = vcmp.gt.s32.totalorder %v398, 0
      %vm415 = vcmp.gt.s32.totalorder %v399, 0
      %vm416 = vcmp.gt.s32.totalorder %v400, 0
      %vm417 = vcmp.gt.s32.totalorder %v401, 0
      %vm418 = vcmp.gt.s32.totalorder %v402, 0
      %vm419 = vcmp.gt.s32.totalorder %v403, 0
      %vm420 = vcmp.gt.s32.totalorder %v404, 0
      %vm421 = vcmp.gt.s32.totalorder %v405, 0
      %vm422 = vcmp.gt.s32.totalorder %v406, 0
      %vm423 = vcmp.gt.s32.totalorder %v407, 0
      %vm424 = vcmp.gt.s32.totalorder %v408, 0
      %vm425 = vcmp.gt.s32.totalorder %v409, 0
      %vm426 = vcmp.lt.s32.totalorder %v394, 15
      %vm427 = vcmp.lt.s32.totalorder %v395, 15
      %vm428 = vcmp.lt.s32.totalorder %v396, 15
      %vm429 = vcmp.lt.s32.totalorder %v397, 15
      %vm430 = vcmp.lt.s32.totalorder %v398, 15
      %vm431 = vcmp.lt.s32.totalorder %v399, 15
      %vm432 = vcmp.lt.s32.totalorder %v400, 15
      %vm433 = vcmp.lt.s32.totalorder %v401, 15
      %vm434 = vcmp.lt.s32.totalorder %v402, 15
      %vm435 = vcmp.lt.s32.totalorder %v403, 15
      %vm436 = vcmp.lt.s32.totalorder %v404, 15
      %vm437 = vcmp.lt.s32.totalorder %v405, 15
      %vm438 = vcmp.lt.s32.totalorder %v406, 15
      %vm439 = vcmp.lt.s32.totalorder %v407, 15
      %vm440 = vcmp.lt.s32.totalorder %v408, 15
      %vm441 = vcmp.lt.s32.totalorder %v409, 15
      %v442 = vld [vmem:[%s193] sm:$0xff]
      %v443 = vld [vmem:[%s193 + $0x8] sm:$0xff]
      %v444 = vld [vmem:[%s193 + $0x10] sm:$0xff]
      %v445 = vld [vmem:[%s193 + $0x18] sm:$0xff]
      %v446 = vld [vmem:[%s193 + $0x20] sm:$0xff]
      %v447 = vld [vmem:[%s193 + $0x28] sm:$0xff]
      %v448 = vld [vmem:[%s193 + $0x30] sm:$0xff]
      %v449 = vld [vmem:[%s193 + $0x38] sm:$0xff]
      %v450 = vld [vmem:[%s193 + $0x40] sm:$0xff]
      %v451 = vld [vmem:[%s193 + $0x48] sm:$0xff]
      %v452 = vld [vmem:[%s193 + $0x50] sm:$0xff]
      %v453 = vld [vmem:[%s193 + $0x58] sm:$0xff]
      %v454 = vld [vmem:[%s193 + $0x60] sm:$0xff]
      %v455 = vld [vmem:[%s193 + $0x68] sm:$0xff]
      %v456 = vld [vmem:[%s193 + $0x70] sm:$0xff]
      %v457 = vld [vmem:[%s193 + $0x78] sm:$0xff]
      %s458 = scalar_lea.vmem %s1, 128
      %v459 = vld [vmem:[%s458] sm:$0xff]
      %v460 = vld [vmem:[%s458 + $0x8] sm:$0xff]
      %v461 = vld [vmem:[%s458 + $0x10] sm:$0xff]
      %v462 = vld [vmem:[%s458 + $0x18] sm:$0xff]
      %v463 = vld [vmem:[%s458 + $0x20] sm:$0xff]
      %v464 = vld [vmem:[%s458 + $0x28] sm:$0xff]
      %v465 = vld [vmem:[%s458 + $0x30] sm:$0xff]
      %v466 = vld [vmem:[%s458 + $0x38] sm:$0xff]
      %v467 = vld [vmem:[%s458 + $0x40] sm:$0xff]
      %v468 = vld [vmem:[%s458 + $0x48] sm:$0xff]
      %v469 = vld [vmem:[%s458 + $0x50] sm:$0xff]
      %v470 = vld [vmem:[%s458 + $0x58] sm:$0xff]
      %v471 = vld [vmem:[%s458 + $0x60] sm:$0xff]
      %v472 = vld [vmem:[%s458 + $0x68] sm:$0xff]
      %v473 = vld [vmem:[%s458 + $0x70] sm:$0xff]
      %v474 = vld [vmem:[%s458 + $0x78] sm:$0xff]
      %vm491 = vcmask 1040384
      %v492 = vrot.slane %v442, 7
      %v493 = vrot.slane %v443, 7
      %v494 = vsel %vm491, %v492, %v493
      %v495 = vrot.slane %v444, 7
      %v496 = vsel %vm491, %v493, %v495
      %v497 = vrot.slane %v445, 7
      %v498 = vsel %vm491, %v495, %v497
      %v499 = vrot.slane %v446, 7
      %v500 = vsel %vm491, %v497, %v499
      %v501 = vrot.slane %v447, 7
      %v502 = vsel %vm491, %v499, %v501
      %v503 = vrot.slane %v448, 7
      %v504 = vsel %vm491, %v501, %v503
      %v505 = vrot.slane %v449, 7
      %v506 = vsel %vm491, %v503, %v505
      %v507 = vrot.slane %v450, 7
      %v508 = vsel %vm491, %v505, %v507
      %v509 = vrot.slane %v451, 7
      %v510 = vsel %vm491, %v507, %v509
      %v511 = vrot.slane %v452, 7
      %v512 = vsel %vm491, %v509, %v511
      %v513 = vrot.slane %v453, 7
      %v514 = vsel %vm491, %v511, %v513
      %v515 = vrot.slane %v454, 7
      %v516 = vsel %vm491, %v513, %v515
      %v517 = vrot.slane %v455, 7
      %v518 = vsel %vm491, %v515, %v517
      %v519 = vrot.slane %v456, 7
      %v520 = vsel %vm491, %v517, %v519
      %v521 = vrot.slane %v457, 7
      %v522 = vsel %vm491, %v519, %v521
      %v539 = vsel %vm491, 0.0, %v492
      %v540 = vsel %vm410, 1, 0
      %v541 = vsel %vm411, 1, 0
      %v542 = vsel %vm412, 1, 0
      %v543 = vsel %vm413, 1, 0
      %v544 = vsel %vm414, 1, 0
      %v545 = vsel %vm415, 1, 0
      %v546 = vsel %vm416, 1, 0
      %v547 = vsel %vm417, 1, 0
      %v548 = vsel %vm418, 1, 0
      %v549 = vsel %vm419, 1, 0
      %v550 = vsel %vm420, 1, 0
      %v551 = vsel %vm421, 1, 0
      %v552 = vsel %vm422, 1, 0
      %v553 = vsel %vm423, 1, 0
      %v554 = vsel %vm424, 1, 0
      %v555 = vsel %vm425, 1, 0
      %vm556 = vcmp.eq.s32.totalorder %v540, 1
      %vm557 = vcmp.eq.s32.totalorder %v541, 1
      %vm558 = vcmp.eq.s32.totalorder %v542, 1
      %vm559 = vcmp.eq.s32.totalorder %v543, 1
      %vm560 = vcmp.eq.s32.totalorder %v544, 1
      %vm561 = vcmp.eq.s32.totalorder %v545, 1
      %vm562 = vcmp.eq.s32.totalorder %v546, 1
      %vm563 = vcmp.eq.s32.totalorder %v547, 1
      %vm564 = vcmp.eq.s32.totalorder %v548, 1
      %vm565 = vcmp.eq.s32.totalorder %v549, 1
      %vm566 = vcmp.eq.s32.totalorder %v550, 1
      %vm567 = vcmp.eq.s32.totalorder %v551, 1
      %vm568 = vcmp.eq.s32.totalorder %v552, 1
      %vm569 = vcmp.eq.s32.totalorder %v553, 1
      %vm570 = vcmp.eq.s32.totalorder %v554, 1
      %vm571 = vcmp.eq.s32.totalorder %v555, 1
      %v572 = vsel %vm556, %v539, 0.0
      %v573 = vsel %vm557, %v494, 0.0
      %v574 = vsel %vm558, %v496, 0.0
      %v575 = vsel %vm559, %v498, 0.0
      %v576 = vsel %vm560, %v500, 0.0
      %v577 = vsel %vm561, %v502, 0.0
      %v578 = vsel %vm562, %v504, 0.0
      %v579 = vsel %vm563, %v506, 0.0
      %v580 = vsel %vm564, %v508, 0.0
      %v581 = vsel %vm565, %v510, 0.0
      %v582 = vsel %vm566, %v512, 0.0
      %v583 = vsel %vm567, %v514, 0.0
      %v584 = vsel %vm568, %v516, 0.0
      %v585 = vsel %vm569, %v518, 0.0
      %v586 = vsel %vm570, %v520, 0.0
      %v587 = vsel %vm571, %v522, 0.0
      %v588 = vld [vmem:[%s1] sm:$0xff]
      %v589 = vld [vmem:[%s1 + $0x8] sm:$0xff]
      %v590 = vld [vmem:[%s1 + $0x10] sm:$0xff]
      %v591 = vld [vmem:[%s1 + $0x18] sm:$0xff]
      %v592 = vld [vmem:[%s1 + $0x20] sm:$0xff]
      %v593 = vld [vmem:[%s1 + $0x28] sm:$0xff]
      %v594 = vld [vmem:[%s1 + $0x30] sm:$0xff]
      %v595 = vld [vmem:[%s1 + $0x38] sm:$0xff]
      %v596 = vld [vmem:[%s1 + $0x40] sm:$0xff]
      %v597 = vld [vmem:[%s1 + $0x48] sm:$0xff]
      %v598 = vld [vmem:[%s1 + $0x50] sm:$0xff]
      %v599 = vld [vmem:[%s1 + $0x58] sm:$0xff]
      %v600 = vld [vmem:[%s1 + $0x60] sm:$0xff]
      %v601 = vld [vmem:[%s1 + $0x68] sm:$0xff]
      %v602 = vld [vmem:[%s1 + $0x70] sm:$0xff]
      %v603 = vld [vmem:[%s1 + $0x78] sm:$0xff]
      %604 = vmatprep.subr.mxu0 0.0
      %605 = vmatpush1.msra.mxu0 %v603
      %606 = vmatprep.subr.mxu0 0.0
      %607 = vmatpush1.msra.mxu0 %v602
      %608 = vmatprep.subr.mxu0 0.0
      %609 = vmatpush1.msra.mxu0 %v601
      %610 = vmatprep.subr.mxu0 0.0
      %611 = vmatpush1.msra.mxu0 %v600
      %612 = vmatprep.subr.mxu0 0.0
      %613 = vmatpush1.msra.mxu0 %v599
      %614 = vmatprep.subr.mxu0 0.0
      %615 = vmatpush1.msra.mxu0 %v598
      %616 = vmatprep.subr.mxu0 0.0
      %617 = vmatpush1.msra.mxu0 %v597
      %618 = vmatprep.subr.mxu0 0.0
      %619 = vmatpush1.msra.mxu0 %v596
      %620 = vmatprep.subr.mxu0 0.0
      %621 = vmatpush1.msra.mxu0 %v595
      %622 = vmatprep.subr.mxu0 0.0
      %623 = vmatpush1.msra.mxu0 %v594
      %624 = vmatprep.subr.mxu0 0.0
      %625 = vmatpush1.msra.mxu0 %v593
      %626 = vmatprep.subr.mxu0 0.0
      %627 = vmatpush1.msra.mxu0 %v592
      %628 = vmatprep.subr.mxu0 0.0
      %629 = vmatpush1.msra.mxu0 %v591
      %630 = vmatprep.subr.mxu0 0.0
      %631 = vmatpush1.msra.mxu0 %v590
      %632 = vmatprep.subr.mxu0 0.0
      %633 = vmatpush1.msra.mxu0 %v589
      %634 = vmatprep.subr.mxu0 0.0
      %635 = vmatpush1.msra.mxu0 %v588
      %636 = vmatprep.subr.mxu0 0.0
      %637 = vmatpush2.msra.mxu0 0.0
      %638 = vmatprep.subr.mxu0 0.0
      %639 = vmatpush2.msra.mxu0 0.0
      %640 = vmatprep.subr.mxu0 0.0
      %641 = vmatpush2.msra.mxu0 0.0
      %642 = vmatprep.subr.mxu0 0.0
      %643 = vmatpush2.msra.mxu0 0.0
      %644 = vmatprep.subr.mxu0 0.0
      %645 = vmatpush2.msra.mxu0 0.0
      %646 = vmatprep.subr.mxu0 0.0
      %647 = vmatpush2.msra.mxu0 0.0
      %648 = vmatprep.subr.mxu0 0.0
      %649 = vmatpush2.msra.mxu0 0.0
      %650 = vmatprep.subr.mxu0 0.0
      %651 = vmatpush2.msra.mxu0 0.0
      %652 = vmatprep.subr.mxu0 0.0
      %653 = vmatpush2.msra.mxu0 0.0
      %654 = vmatprep.subr.mxu0 0.0
      %655 = vmatpush2.msra.mxu0 0.0
      %656 = vmatprep.subr.mxu0 0.0
      %657 = vmatpush2.msra.mxu0 0.0
      %658 = vmatprep.subr.mxu0 0.0
      %659 = vmatpush2.msra.mxu0 0.0
      %660 = vmatprep.subr.mxu0 0.0
      %661 = vmatpush2.msra.mxu0 0.0
      %662 = vmatprep.subr.mxu0 0.0
      %663 = vmatpush2.msra.mxu0 0.0
      %664 = vmatprep.subr.mxu0 0.0
      %665 = vmatpush2.msra.mxu0 0.0
      %666 = vmatprep.subr.mxu0 0.0
      %667 = vmatpush2.msra.mxu0 0.0
      %668 = vmatprep.mubr.f32.mxu0 0.0
      %669 = vmatmul.mubr.f32.gmra.mxu0 %v572
      %v670 = vpop.f32.mrf.mxu0
      %v671 = vadd.f32 0.0, %v670
      %v672 = vpop.f32.mrf.mxu0
      %673 = vmatprep.mubr.f32.mxu0 0.0
      %674 = vmatmul.mubr.f32.gmra.mxu0 %v573
      %v675 = vpop.f32.mrf.mxu0
      %v676 = vadd.f32 0.0, %v675
      %v677 = vpop.f32.mrf.mxu0
      %678 = vmatprep.mubr.f32.mxu0 0.0
      %679 = vmatmul.mubr.f32.gmra.mxu0 %v574
      %v680 = vpop.f32.mrf.mxu0
      %v681 = vadd.f32 0.0, %v680
      %v682 = vpop.f32.mrf.mxu0
      %683 = vmatprep.mubr.f32.mxu0 0.0
      %684 = vmatmul.mubr.f32.gmra.mxu0 %v575
      %v685 = vpop.f32.mrf.mxu0
      %v686 = vadd.f32 0.0, %v685
      %v687 = vpop.f32.mrf.mxu0
      %688 = vmatprep.mubr.f32.mxu0 0.0
      %689 = vmatmul.mubr.f32.gmra.mxu0 %v576
      %v690 = vpop.f32.mrf.mxu0
      %v691 = vadd.f32 0.0, %v690
      %v692 = vpop.f32.mrf.mxu0
      %693 = vmatprep.mubr.f32.mxu0 0.0
      %694 = vmatmul.mubr.f32.gmra.mxu0 %v577
      %v695 = vpop.f32.mrf.mxu0
      %v696 = vadd.f32 0.0, %v695
      %v697 = vpop.f32.mrf.mxu0
      %698 = vmatprep.mubr.f32.mxu0 0.0
      %699 = vmatmul.mubr.f32.gmra.mxu0 %v578
      %v700 = vpop.f32.mrf.mxu0
      %v701 = vadd.f32 0.0, %v700
      %v702 = vpop.f32.mrf.mxu0
      %703 = vmatprep.mubr.f32.mxu0 0.0
      %704 = vmatmul.mubr.f32.gmra.mxu0 %v579
      %v705 = vpop.f32.mrf.mxu0
      %v706 = vadd.f32 0.0, %v705
      %v707 = vpop.f32.mrf.mxu0
      %708 = vmatprep.mubr.f32.mxu0 0.0
      %709 = vmatmul.mubr.f32.gmra.mxu0 %v580
      %v710 = vpop.f32.mrf.mxu0
      %v711 = vadd.f32 0.0, %v710
      %v712 = vpop.f32.mrf.mxu0
      %713 = vmatprep.mubr.f32.mxu0 0.0
      %714 = vmatmul.mubr.f32.gmra.mxu0 %v581
      %v715 = vpop.f32.mrf.mxu0
      %v716 = vadd.f32 0.0, %v715
      %v717 = vpop.f32.mrf.mxu0
      %718 = vmatprep.mubr.f32.mxu0 0.0
      %719 = vmatmul.mubr.f32.gmra.mxu0 %v582
      %v720 = vpop.f32.mrf.mxu0
      %v721 = vadd.f32 0.0, %v720
      %v722 = vpop.f32.mrf.mxu0
      %723 = vmatprep.mubr.f32.mxu0 0.0
      %724 = vmatmul.mubr.f32.gmra.mxu0 %v583
      %v725 = vpop.f32.mrf.mxu0
      %v726 = vadd.f32 0.0, %v725
      %v727 = vpop.f32.mrf.mxu0
      %728 = vmatprep.mubr.f32.mxu0 0.0
      %729 = vmatmul.mubr.f32.gmra.mxu0 %v584
      %v730 = vpop.f32.mrf.mxu0
      %v731 = vadd.f32 0.0, %v730
      %v732 = vpop.f32.mrf.mxu0
      %733 = vmatprep.mubr.f32.mxu0 0.0
      %734 = vmatmul.mubr.f32.gmra.mxu0 %v585
      %v735 = vpop.f32.mrf.mxu0
      %v736 = vadd.f32 0.0, %v735
      %v737 = vpop.f32.mrf.mxu0
      %738 = vmatprep.mubr.f32.mxu0 0.0
      %739 = vmatmul.mubr.f32.gmra.mxu0 %v586
      %v740 = vpop.f32.mrf.mxu0
      %v741 = vadd.f32 0.0, %v740
      %v742 = vpop.f32.mrf.mxu0
      %743 = vmatprep.mubr.f32.mxu0 0.0
      %744 = vmatmul.mubr.f32.gmra.mxu0 %v587
      %v745 = vpop.f32.mrf.mxu0
      %v746 = vadd.f32 0.0, %v745
      %v747 = vpop.f32.mrf.mxu0
      %748 = vdwg.mxu0
      %749 = vmatprep.subr.mxu0 0.0
      %750 = vmatpush1.msra.mxu0 %v474
      %751 = vmatprep.subr.mxu0 0.0
      %752 = vmatpush1.msra.mxu0 %v473
      %753 = vmatprep.subr.mxu0 0.0
      %754 = vmatpush1.msra.mxu0 %v472
      %755 = vmatprep.subr.mxu0 0.0
      %756 = vmatpush1.msra.mxu0 %v471
      %757 = vmatprep.subr.mxu0 0.0
      %758 = vmatpush1.msra.mxu0 %v470
      %759 = vmatprep.subr.mxu0 0.0
      %760 = vmatpush1.msra.mxu0 %v469
      %761 = vmatprep.subr.mxu0 0.0
      %762 = vmatpush1.msra.mxu0 %v468
      %763 = vmatprep.subr.mxu0 0.0
      %764 = vmatpush1.msra.mxu0 %v467
      %765 = vmatprep.subr.mxu0 0.0
      %766 = vmatpush1.msra.mxu0 %v466
      %767 = vmatprep.subr.mxu0 0.0
      %768 = vmatpush1.msra.mxu0 %v465
      %769 = vmatprep.subr.mxu0 0.0
      %770 = vmatpush1.msra.mxu0 %v464
      %771 = vmatprep.subr.mxu0 0.0
      %772 = vmatpush1.msra.mxu0 %v463
      %773 = vmatprep.subr.mxu0 0.0
      %774 = vmatpush1.msra.mxu0 %v462
      %775 = vmatprep.subr.mxu0 0.0
      %776 = vmatpush1.msra.mxu0 %v461
      %777 = vmatprep.subr.mxu0 0.0
      %778 = vmatpush1.msra.mxu0 %v460
      %779 = vmatprep.subr.mxu0 0.0
      %780 = vmatpush1.msra.mxu0 %v459
      %781 = vmatprep.subr.mxu0 0.0
      %782 = vmatpush2.msra.mxu0 0.0
      %783 = vmatprep.subr.mxu0 0.0
      %784 = vmatpush2.msra.mxu0 0.0
      %785 = vmatprep.subr.mxu0 0.0
      %786 = vmatpush2.msra.mxu0 0.0
      %787 = vmatprep.subr.mxu0 0.0
      %788 = vmatpush2.msra.mxu0 0.0
      %789 = vmatprep.subr.mxu0 0.0
      %790 = vmatpush2.msra.mxu0 0.0
      %791 = vmatprep.subr.mxu0 0.0
      %792 = vmatpush2.msra.mxu0 0.0
      %793 = vmatprep.subr.mxu0 0.0
      %794 = vmatpush2.msra.mxu0 0.0
      %795 = vmatprep.subr.mxu0 0.0
      %796 = vmatpush2.msra.mxu0 0.0
      %797 = vmatprep.subr.mxu0 0.0
      %798 = vmatpush2.msra.mxu0 0.0
      %799 = vmatprep.subr.mxu0 0.0
      %800 = vmatpush2.msra.mxu0 0.0
      %801 = vmatprep.subr.mxu0 0.0
      %802 = vmatpush2.msra.mxu0 0.0
      %803 = vmatprep.subr.mxu0 0.0
      %804 = vmatpush2.msra.mxu0 0.0
      %805 = vmatprep.subr.mxu0 0.0
      %806 = vmatpush2.msra.mxu0 0.0
      %807 = vmatprep.subr.mxu0 0.0
      %808 = vmatpush2.msra.mxu0 0.0
      %809 = vmatprep.subr.mxu0 0.0
      %810 = vmatpush2.msra.mxu0 0.0
      %811 = vmatprep.subr.mxu0 0.0
      %812 = vmatpush2.msra.mxu0 0.0
      %813 = vmatprep.mubr.f32.mxu0 0.0
      %814 = vmatmul.mubr.f32.gmra.mxu0 %v442
      %v815 = vpop.f32.mrf.mxu0
      %v816 = vadd.f32 %v671, %v815
      %v817 = vpop.f32.mrf.mxu0
      %818 = vmatprep.mubr.f32.mxu0 0.0
      %819 = vmatmul.mubr.f32.gmra.mxu0 %v443
      %v820 = vpop.f32.mrf.mxu0
      %v821 = vadd.f32 %v676, %v820
      %v822 = vpop.f32.mrf.mxu0
      %823 = vmatprep.mubr.f32.mxu0 0.0
      %824 = vmatmul.mubr.f32.gmra.mxu0 %v444
      %v825 = vpop.f32.mrf.mxu0
      %v826 = vadd.f32 %v681, %v825
      %v827 = vpop.f32.mrf.mxu0
      %828 = vmatprep.mubr.f32.mxu0 0.0
      %829 = vmatmul.mubr.f32.gmra.mxu0 %v445
      %v830 = vpop.f32.mrf.mxu0
      %v831 = vadd.f32 %v686, %v830
      %v832 = vpop.f32.mrf.mxu0
      %833 = vmatprep.mubr.f32.mxu0 0.0
      %834 = vmatmul.mubr.f32.gmra.mxu0 %v446
      %v835 = vpop.f32.mrf.mxu0
      %v836 = vadd.f32 %v691, %v835
      %v837 = vpop.f32.mrf.mxu0
      %838 = vmatprep.mubr.f32.mxu0 0.0
      %839 = vmatmul.mubr.f32.gmra.mxu0 %v447
      %v840 = vpop.f32.mrf.mxu0
      %v841 = vadd.f32 %v696, %v840
      %v842 = vpop.f32.mrf.mxu0
      %843 = vmatprep.mubr.f32.mxu0 0.0
      %844 = vmatmul.mubr.f32.gmra.mxu0 %v448
      %v845 = vpop.f32.mrf.mxu0
      %v846 = vadd.f32 %v701, %v845
      %v847 = vpop.f32.mrf.mxu0
      %848 = vmatprep.mubr.f32.mxu0 0.0
      %849 = vmatmul.mubr.f32.gmra.mxu0 %v449
      %v850 = vpop.f32.mrf.mxu0
      %v851 = vadd.f32 %v706, %v850
      %v852 = vpop.f32.mrf.mxu0
      %853 = vmatprep.mubr.f32.mxu0 0.0
      %854 = vmatmul.mubr.f32.gmra.mxu0 %v450
      %v855 = vpop.f32.mrf.mxu0
      %v856 = vadd.f32 %v711, %v855
      %v857 = vpop.f32.mrf.mxu0
      %858 = vmatprep.mubr.f32.mxu0 0.0
      %859 = vmatmul.mubr.f32.gmra.mxu0 %v451
      %v860 = vpop.f32.mrf.mxu0
      %v861 = vadd.f32 %v716, %v860
      %v862 = vpop.f32.mrf.mxu0
      %863 = vmatprep.mubr.f32.mxu0 0.0
      %864 = vmatmul.mubr.f32.gmra.mxu0 %v452
      %v865 = vpop.f32.mrf.mxu0
      %v866 = vadd.f32 %v721, %v865
      %v867 = vpop.f32.mrf.mxu0
      %868 = vmatprep.mubr.f32.mxu0 0.0
      %869 = vmatmul.mubr.f32.gmra.mxu0 %v453
      %v870 = vpop.f32.mrf.mxu0
      %v871 = vadd.f32 %v726, %v870
      %v872 = vpop.f32.mrf.mxu0
      %873 = vmatprep.mubr.f32.mxu0 0.0
      %874 = vmatmul.mubr.f32.gmra.mxu0 %v454
      %v875 = vpop.f32.mrf.mxu0
      %v876 = vadd.f32 %v731, %v875
      %v877 = vpop.f32.mrf.mxu0
      %878 = vmatprep.mubr.f32.mxu0 0.0
      %879 = vmatmul.mubr.f32.gmra.mxu0 %v455
      %v880 = vpop.f32.mrf.mxu0
      %v881 = vadd.f32 %v736, %v880
      %v882 = vpop.f32.mrf.mxu0
      %883 = vmatprep.mubr.f32.mxu0 0.0
      %884 = vmatmul.mubr.f32.gmra.mxu0 %v456
      %v885 = vpop.f32.mrf.mxu0
      %v886 = vadd.f32 %v741, %v885
      %v887 = vpop.f32.mrf.mxu0
      %888 = vmatprep.mubr.f32.mxu0 0.0
      %889 = vmatmul.mubr.f32.gmra.mxu0 %v457
      %v890 = vpop.f32.mrf.mxu0
      %v891 = vadd.f32 %v746, %v890
      %v892 = vpop.f32.mrf.mxu0
      %893 = vdwg.mxu0
      %vm894 = vcmask 1046528
      %v895 = vrot.slane %v442, 1
      %v896 = vrot.slane %v443, 1
      %v897 = vsel %vm894, %v895, %v896
      %v898 = vrot.slane %v444, 1
      %v899 = vsel %vm894, %v896, %v898
      %v900 = vrot.slane %v445, 1
      %v901 = vsel %vm894, %v898, %v900
      %v902 = vrot.slane %v446, 1
      %v903 = vsel %vm894, %v900, %v902
      %v904 = vrot.slane %v447, 1
      %v905 = vsel %vm894, %v902, %v904
      %v906 = vrot.slane %v448, 1
      %v907 = vsel %vm894, %v904, %v906
      %v908 = vrot.slane %v449, 1
      %v909 = vsel %vm894, %v906, %v908
      %v910 = vrot.slane %v450, 1
      %v911 = vsel %vm894, %v908, %v910
      %v912 = vrot.slane %v451, 1
      %v913 = vsel %vm894, %v910, %v912
      %v914 = vrot.slane %v452, 1
      %v915 = vsel %vm894, %v912, %v914
      %v916 = vrot.slane %v453, 1
      %v917 = vsel %vm894, %v914, %v916
      %v918 = vrot.slane %v454, 1
      %v919 = vsel %vm894, %v916, %v918
      %v920 = vrot.slane %v455, 1
      %v921 = vsel %vm894, %v918, %v920
      %v922 = vrot.slane %v456, 1
      %v923 = vsel %vm894, %v920, %v922
      %v924 = vrot.slane %v457, 1
      %v925 = vsel %vm894, %v922, %v924
      %v942 = vsel %vm894, %v924, 0.0
      %v943 = vsel %vm426, 1, 0
      %v944 = vsel %vm427, 1, 0
      %v945 = vsel %vm428, 1, 0
      %v946 = vsel %vm429, 1, 0
      %v947 = vsel %vm430, 1, 0
      %v948 = vsel %vm431, 1, 0
      %v949 = vsel %vm432, 1, 0
      %v950 = vsel %vm433, 1, 0
      %v951 = vsel %vm434, 1, 0
      %v952 = vsel %vm435, 1, 0
      %v953 = vsel %vm436, 1, 0
      %v954 = vsel %vm437, 1, 0
      %v955 = vsel %vm438, 1, 0
      %v956 = vsel %vm439, 1, 0
      %v957 = vsel %vm440, 1, 0
      %v958 = vsel %vm441, 1, 0
      %vm959 = vcmp.eq.s32.totalorder %v943, 1
      %vm960 = vcmp.eq.s32.totalorder %v944, 1
      %vm961 = vcmp.eq.s32.totalorder %v945, 1
      %vm962 = vcmp.eq.s32.totalorder %v946, 1
      %vm963 = vcmp.eq.s32.totalorder %v947, 1
      %vm964 = vcmp.eq.s32.totalorder %v948, 1
      %vm965 = vcmp.eq.s32.totalorder %v949, 1
      %vm966 = vcmp.eq.s32.totalorder %v950, 1
      %vm967 = vcmp.eq.s32.totalorder %v951, 1
      %vm968 = vcmp.eq.s32.totalorder %v952, 1
      %vm969 = vcmp.eq.s32.totalorder %v953, 1
      %vm970 = vcmp.eq.s32.totalorder %v954, 1
      %vm971 = vcmp.eq.s32.totalorder %v955, 1
      %vm972 = vcmp.eq.s32.totalorder %v956, 1
      %vm973 = vcmp.eq.s32.totalorder %v957, 1
      %vm974 = vcmp.eq.s32.totalorder %v958, 1
      %v975 = vsel %vm959, %v897, 0.0
      %v976 = vsel %vm960, %v899, 0.0
      %v977 = vsel %vm961, %v901, 0.0
      %v978 = vsel %vm962, %v903, 0.0
      %v979 = vsel %vm963, %v905, 0.0
      %v980 = vsel %vm964, %v907, 0.0
      %v981 = vsel %vm965, %v909, 0.0
      %v982 = vsel %vm966, %v911, 0.0
      %v983 = vsel %vm967, %v913, 0.0
      %v984 = vsel %vm968, %v915, 0.0
      %v985 = vsel %vm969, %v917, 0.0
      %v986 = vsel %vm970, %v919, 0.0
      %v987 = vsel %vm971, %v921, 0.0
      %v988 = vsel %vm972, %v923, 0.0
      %v989 = vsel %vm973, %v925, 0.0
      %v990 = vsel %vm974, %v942, 0.0
      %s991 = scalar_lea.vmem %s1, 256
      %v992 = vld [vmem:[%s991] sm:$0xff]
      %v993 = vld [vmem:[%s991 + $0x8] sm:$0xff]
      %v994 = vld [vmem:[%s991 + $0x10] sm:$0xff]
      %v995 = vld [vmem:[%s991 + $0x18] sm:$0xff]
      %v996 = vld [vmem:[%s991 + $0x20] sm:$0xff]
      %v997 = vld [vmem:[%s991 + $0x28] sm:$0xff]
      %v998 = vld [vmem:[%s991 + $0x30] sm:$0xff]
      %v999 = vld [vmem:[%s991 + $0x38] sm:$0xff]
      %v1000 = vld [vmem:[%s991 + $0x40] sm:$0xff]
      %v1001 = vld [vmem:[%s991 + $0x48] sm:$0xff]
      %v1002 = vld [vmem:[%s991 + $0x50] sm:$0xff]
      %v1003 = vld [vmem:[%s991 + $0x58] sm:$0xff]
      %v1004 = vld [vmem:[%s991 + $0x60] sm:$0xff]
      %v1005 = vld [vmem:[%s991 + $0x68] sm:$0xff]
      %v1006 = vld [vmem:[%s991 + $0x70] sm:$0xff]
      %v1007 = vld [vmem:[%s991 + $0x78] sm:$0xff]
      %1008 = vmatprep.subr.mxu0 0.0
      %1009 = vmatpush1.msra.mxu0 %v1007
      %1010 = vmatprep.subr.mxu0 0.0
      %1011 = vmatpush1.msra.mxu0 %v1006
      %1012 = vmatprep.subr.mxu0 0.0
      %1013 = vmatpush1.msra.mxu0 %v1005
      %1014 = vmatprep.subr.mxu0 0.0
      %1015 = vmatpush1.msra.mxu0 %v1004
      %1016 = vmatprep.subr.mxu0 0.0
      %1017 = vmatpush1.msra.mxu0 %v1003
      %1018 = vmatprep.subr.mxu0 0.0
      %1019 = vmatpush1.msra.mxu0 %v1002
      %1020 = vmatprep.subr.mxu0 0.0
      %1021 = vmatpush1.msra.mxu0 %v1001
      %1022 = vmatprep.subr.mxu0 0.0
      %1023 = vmatpush1.msra.mxu0 %v1000
      %1024 = vmatprep.subr.mxu0 0.0
      %1025 = vmatpush1.msra.mxu0 %v999
      %1026 = vmatprep.subr.mxu0 0.0
      %1027 = vmatpush1.msra.mxu0 %v998
      %1028 = vmatprep.subr.mxu0 0.0
      %1029 = vmatpush1.msra.mxu0 %v997
      %1030 = vmatprep.subr.mxu0 0.0
      %1031 = vmatpush1.msra.mxu0 %v996
      %1032 = vmatprep.subr.mxu0 0.0
      %1033 = vmatpush1.msra.mxu0 %v995
      %1034 = vmatprep.subr.mxu0 0.0
      %1035 = vmatpush1.msra.mxu0 %v994
      %1036 = vmatprep.subr.mxu0 0.0
      %1037 = vmatpush1.msra.mxu0 %v993
      %1038 = vmatprep.subr.mxu0 0.0
      %1039 = vmatpush1.msra.mxu0 %v992
      %1040 = vmatprep.subr.mxu0 0.0
      %1041 = vmatpush2.msra.mxu0 0.0
      %1042 = vmatprep.subr.mxu0 0.0
      %1043 = vmatpush2.msra.mxu0 0.0
      %1044 = vmatprep.subr.mxu0 0.0
      %1045 = vmatpush2.msra.mxu0 0.0
      %1046 = vmatprep.subr.mxu0 0.0
      %1047 = vmatpush2.msra.mxu0 0.0
      %1048 = vmatprep.subr.mxu0 0.0
      %1049 = vmatpush2.msra.mxu0 0.0
      %1050 = vmatprep.subr.mxu0 0.0
      %1051 = vmatpush2.msra.mxu0 0.0
      %1052 = vmatprep.subr.mxu0 0.0
      %1053 = vmatpush2.msra.mxu0 0.0
      %1054 = vmatprep.subr.mxu0 0.0
      %1055 = vmatpush2.msra.mxu0 0.0
      %1056 = vmatprep.subr.mxu0 0.0
      %1057 = vmatpush2.msra.mxu0 0.0
      %1058 = vmatprep.subr.mxu0 0.0
      %1059 = vmatpush2.msra.mxu0 0.0
      %1060 = vmatprep.subr.mxu0 0.0
      %1061 = vmatpush2.msra.mxu0 0.0
      %1062 = vmatprep.subr.mxu0 0.0
      %1063 = vmatpush2.msra.mxu0 0.0
      %1064 = vmatprep.subr.mxu0 0.0
      %1065 = vmatpush2.msra.mxu0 0.0
      %1066 = vmatprep.subr.mxu0 0.0
      %1067 = vmatpush2.msra.mxu0 0.0
      %1068 = vmatprep.subr.mxu0 0.0
      %1069 = vmatpush2.msra.mxu0 0.0
      %1070 = vmatprep.subr.mxu0 0.0
      %1071 = vmatpush2.msra.mxu0 0.0
      %1072 = vmatprep.mubr.f32.mxu0 0.0
      %1073 = vmatmul.mubr.f32.gmra.mxu0 %v975
      %v1074 = vpop.f32.mrf.mxu0
      %v1075 = vadd.f32 0.0, %v1074
      %v1076 = vpop.f32.mrf.mxu0
      %1077 = vmatprep.mubr.f32.mxu0 0.0
      %1078 = vmatmul.mubr.f32.gmra.mxu0 %v976
      %v1079 = vpop.f32.mrf.mxu0
      %v1080 = vadd.f32 0.0, %v1079
      %v1081 = vpop.f32.mrf.mxu0
      %1082 = vmatprep.mubr.f32.mxu0 0.0
      %1083 = vmatmul.mubr.f32.gmra.mxu0 %v977
      %v1084 = vpop.f32.mrf.mxu0
      %v1085 = vadd.f32 0.0, %v1084
      %v1086 = vpop.f32.mrf.mxu0
      %1087 = vmatprep.mubr.f32.mxu0 0.0
      %1088 = vmatmul.mubr.f32.gmra.mxu0 %v978
      %v1089 = vpop.f32.mrf.mxu0
      %v1090 = vadd.f32 0.0, %v1089
      %v1091 = vpop.f32.mrf.mxu0
      %1092 = vmatprep.mubr.f32.mxu0 0.0
      %1093 = vmatmul.mubr.f32.gmra.mxu0 %v979
      %v1094 = vpop.f32.mrf.mxu0
      %v1095 = vadd.f32 0.0, %v1094
      %v1096 = vpop.f32.mrf.mxu0
      %1097 = vmatprep.mubr.f32.mxu0 0.0
      %1098 = vmatmul.mubr.f32.gmra.mxu0 %v980
      %v1099 = vpop.f32.mrf.mxu0
      %v1100 = vadd.f32 0.0, %v1099
      %v1101 = vpop.f32.mrf.mxu0
      %1102 = vmatprep.mubr.f32.mxu0 0.0
      %1103 = vmatmul.mubr.f32.gmra.mxu0 %v981
      %v1104 = vpop.f32.mrf.mxu0
      %v1105 = vadd.f32 0.0, %v1104
      %v1106 = vpop.f32.mrf.mxu0
      %1107 = vmatprep.mubr.f32.mxu0 0.0
      %1108 = vmatmul.mubr.f32.gmra.mxu0 %v982
      %v1109 = vpop.f32.mrf.mxu0
      %v1110 = vadd.f32 0.0, %v1109
      %v1111 = vpop.f32.mrf.mxu0
      %1112 = vmatprep.mubr.f32.mxu0 0.0
      %1113 = vmatmul.mubr.f32.gmra.mxu0 %v983
      %v1114 = vpop.f32.mrf.mxu0
      %v1115 = vadd.f32 0.0, %v1114
      %v1116 = vpop.f32.mrf.mxu0
      %1117 = vmatprep.mubr.f32.mxu0 0.0
      %1118 = vmatmul.mubr.f32.gmra.mxu0 %v984
      %v1119 = vpop.f32.mrf.mxu0
      %v1120 = vadd.f32 0.0, %v1119
      %v1121 = vpop.f32.mrf.mxu0
      %1122 = vmatprep.mubr.f32.mxu0 0.0
      %1123 = vmatmul.mubr.f32.gmra.mxu0 %v985
      %v1124 = vpop.f32.mrf.mxu0
      %v1125 = vadd.f32 0.0, %v1124
      %v1126 = vpop.f32.mrf.mxu0
      %1127 = vmatprep.mubr.f32.mxu0 0.0
      %1128 = vmatmul.mubr.f32.gmra.mxu0 %v986
      %v1129 = vpop.f32.mrf.mxu0
      %v1130 = vadd.f32 0.0, %v1129
      %v1131 = vpop.f32.mrf.mxu0
      %1132 = vmatprep.mubr.f32.mxu0 0.0
      %1133 = vmatmul.mubr.f32.gmra.mxu0 %v987
      %v1134 = vpop.f32.mrf.mxu0
      %v1135 = vadd.f32 0.0, %v1134
      %v1136 = vpop.f32.mrf.mxu0
      %1137 = vmatprep.mubr.f32.mxu0 0.0
      %1138 = vmatmul.mubr.f32.gmra.mxu0 %v988
      %v1139 = vpop.f32.mrf.mxu0
      %v1140 = vadd.f32 0.0, %v1139
      %v1141 = vpop.f32.mrf.mxu0
      %1142 = vmatprep.mubr.f32.mxu0 0.0
      %1143 = vmatmul.mubr.f32.gmra.mxu0 %v989
      %v1144 = vpop.f32.mrf.mxu0
      %v1145 = vadd.f32 0.0, %v1144
      %v1146 = vpop.f32.mrf.mxu0
      %1147 = vmatprep.mubr.f32.mxu0 0.0
      %1148 = vmatmul.mubr.f32.gmra.mxu0 %v990
      %v1149 = vpop.f32.mrf.mxu0
      %v1150 = vadd.f32 0.0, %v1149
      %v1151 = vpop.f32.mrf.mxu0
      %1152 = vdwg.mxu0
      %v1153 = vadd.f32 %v816, %v1075
      %v1154 = vadd.f32 %v821, %v1080
      %v1155 = vadd.f32 %v826, %v1085
      %v1156 = vadd.f32 %v831, %v1090
      %v1157 = vadd.f32 %v836, %v1095
      %v1158 = vadd.f32 %v841, %v1100
      %v1159 = vadd.f32 %v846, %v1105
      %v1160 = vadd.f32 %v851, %v1110
      %v1161 = vadd.f32 %v856, %v1115
      %v1162 = vadd.f32 %v861, %v1120
      %v1163 = vadd.f32 %v866, %v1125
      %v1164 = vadd.f32 %v871, %v1130
      %v1165 = vadd.f32 %v876, %v1135
      %v1166 = vadd.f32 %v881, %v1140
      %v1167 = vadd.f32 %v886, %v1145
      %v1168 = vadd.f32 %v891, %v1150
      %v1169 = vld [vmem:[%s3] sm:$0x1]
      %v1171 = vlaneseq
      %v1172 = vshrl.u32 %v1171, 7
      %v1173 = vsub.s32 0, %v1172
      %v1174 = vrot.slane %v1169, %v1173
      %v1176 = vadd.f32 %v1153, %v1174
      %v1177 = vadd.f32 %v1154, %v1174
      %v1178 = vadd.f32 %v1155, %v1174
      %v1179 = vadd.f32 %v1156, %v1174
      %v1180 = vadd.f32 %v1157, %v1174
      %v1181 = vadd.f32 %v1158, %v1174
      %v1182 = vadd.f32 %v1159, %v1174
      %v1183 = vadd.f32 %v1160, %v1174
      %v1184 = vadd.f32 %v1161, %v1174
      %v1185 = vadd.f32 %v1162, %v1174
      %v1186 = vadd.f32 %v1163, %v1174
      %v1187 = vadd.f32 %v1164, %v1174
      %v1188 = vadd.f32 %v1165, %v1174
      %v1189 = vadd.f32 %v1166, %v1174
      %v1190 = vadd.f32 %v1167, %v1174
      %v1191 = vadd.f32 %v1168, %v1174
      %v1192 = vmax.f32 %v1176, 0.0
      %v1193 = vmax.f32 %v1177, 0.0
      %v1194 = vmax.f32 %v1178, 0.0
      %v1195 = vmax.f32 %v1179, 0.0
      %v1196 = vmax.f32 %v1180, 0.0
      %v1197 = vmax.f32 %v1181, 0.0
      %v1198 = vmax.f32 %v1182, 0.0
      %v1199 = vmax.f32 %v1183, 0.0
      %v1200 = vmax.f32 %v1184, 0.0
      %v1201 = vmax.f32 %v1185, 0.0
      %v1202 = vmax.f32 %v1186, 0.0
      %v1203 = vmax.f32 %v1187, 0.0
      %v1204 = vmax.f32 %v1188, 0.0
      %v1205 = vmax.f32 %v1189, 0.0
      %v1206 = vmax.f32 %v1190, 0.0
      %v1207 = vmax.f32 %v1191, 0.0
      %s1208 = scalar_lea.vmem %s2, 128
      %v1209 = vld [vmem:[%s1208] sm:$0xff]
      %v1210 = vld [vmem:[%s1208 + $0x8] sm:$0xff]
      %v1211 = vld [vmem:[%s1208 + $0x10] sm:$0xff]
      %v1212 = vld [vmem:[%s1208 + $0x18] sm:$0xff]
      %v1213 = vld [vmem:[%s1208 + $0x20] sm:$0xff]
      %v1214 = vld [vmem:[%s1208 + $0x28] sm:$0xff]
      %v1215 = vld [vmem:[%s1208 + $0x30] sm:$0xff]
      %v1216 = vld [vmem:[%s1208 + $0x38] sm:$0xff]
      %v1217 = vld [vmem:[%s1208 + $0x40] sm:$0xff]
      %v1218 = vld [vmem:[%s1208 + $0x48] sm:$0xff]
      %v1219 = vld [vmem:[%s1208 + $0x50] sm:$0xff]
      %v1220 = vld [vmem:[%s1208 + $0x58] sm:$0xff]
      %v1221 = vld [vmem:[%s1208 + $0x60] sm:$0xff]
      %v1222 = vld [vmem:[%s1208 + $0x68] sm:$0xff]
      %v1223 = vld [vmem:[%s1208 + $0x70] sm:$0xff]
      %v1224 = vld [vmem:[%s1208 + $0x78] sm:$0xff]
      %v1241 = vrot.slane %v1192, 7
      %v1242 = vrot.slane %v1193, 7
      %v1243 = vsel %vm491, %v1241, %v1242
      %v1244 = vrot.slane %v1194, 7
      %v1245 = vsel %vm491, %v1242, %v1244
      %v1246 = vrot.slane %v1195, 7
      %v1247 = vsel %vm491, %v1244, %v1246
      %v1248 = vrot.slane %v1196, 7
      %v1249 = vsel %vm491, %v1246, %v1248
      %v1250 = vrot.slane %v1197, 7
      %v1251 = vsel %vm491, %v1248, %v1250
      %v1252 = vrot.slane %v1198, 7
      %v1253 = vsel %vm491, %v1250, %v1252
      %v1254 = vrot.slane %v1199, 7
      %v1255 = vsel %vm491, %v1252, %v1254
      %v1256 = vrot.slane %v1200, 7
      %v1257 = vsel %vm491, %v1254, %v1256
      %v1258 = vrot.slane %v1201, 7
      %v1259 = vsel %vm491, %v1256, %v1258
      %v1260 = vrot.slane %v1202, 7
      %v1261 = vsel %vm491, %v1258, %v1260
      %v1262 = vrot.slane %v1203, 7
      %v1263 = vsel %vm491, %v1260, %v1262
      %v1264 = vrot.slane %v1204, 7
      %v1265 = vsel %vm491, %v1262, %v1264
      %v1266 = vrot.slane %v1205, 7
      %v1267 = vsel %vm491, %v1264, %v1266
      %v1268 = vrot.slane %v1206, 7
      %v1269 = vsel %vm491, %v1266, %v1268
      %v1270 = vrot.slane %v1207, 7
      %v1271 = vsel %vm491, %v1268, %v1270
      %v1288 = vsel %vm491, 0.0, %v1241
      %v1289 = vsel %vm556, %v1288, 0.0
      %v1290 = vsel %vm557, %v1243, 0.0
      %v1291 = vsel %vm558, %v1245, 0.0
      %v1292 = vsel %vm559, %v1247, 0.0
      %v1293 = vsel %vm560, %v1249, 0.0
      %v1294 = vsel %vm561, %v1251, 0.0
      %v1295 = vsel %vm562, %v1253, 0.0
      %v1296 = vsel %vm563, %v1255, 0.0
      %v1297 = vsel %vm564, %v1257, 0.0
      %v1298 = vsel %vm565, %v1259, 0.0
      %v1299 = vsel %vm566, %v1261, 0.0
      %v1300 = vsel %vm567, %v1263, 0.0
      %v1301 = vsel %vm568, %v1265, 0.0
      %v1302 = vsel %vm569, %v1267, 0.0
      %v1303 = vsel %vm570, %v1269, 0.0
      %v1304 = vsel %vm571, %v1271, 0.0
      %v1305 = vld [vmem:[%s2] sm:$0xff]
      %v1306 = vld [vmem:[%s2 + $0x8] sm:$0xff]
      %v1307 = vld [vmem:[%s2 + $0x10] sm:$0xff]
      %v1308 = vld [vmem:[%s2 + $0x18] sm:$0xff]
      %v1309 = vld [vmem:[%s2 + $0x20] sm:$0xff]
      %v1310 = vld [vmem:[%s2 + $0x28] sm:$0xff]
      %v1311 = vld [vmem:[%s2 + $0x30] sm:$0xff]
      %v1312 = vld [vmem:[%s2 + $0x38] sm:$0xff]
      %v1313 = vld [vmem:[%s2 + $0x40] sm:$0xff]
      %v1314 = vld [vmem:[%s2 + $0x48] sm:$0xff]
      %v1315 = vld [vmem:[%s2 + $0x50] sm:$0xff]
      %v1316 = vld [vmem:[%s2 + $0x58] sm:$0xff]
      %v1317 = vld [vmem:[%s2 + $0x60] sm:$0xff]
      %v1318 = vld [vmem:[%s2 + $0x68] sm:$0xff]
      %v1319 = vld [vmem:[%s2 + $0x70] sm:$0xff]
      %v1320 = vld [vmem:[%s2 + $0x78] sm:$0xff]
      %1321 = vmatprep.subr.mxu0 0.0
      %1322 = vmatpush1.msra.mxu0 %v1320
      %1323 = vmatprep.subr.mxu0 0.0
      %1324 = vmatpush1.msra.mxu0 %v1319
      %1325 = vmatprep.subr.mxu0 0.0
      %1326 = vmatpush1.msra.mxu0 %v1318
      %1327 = vmatprep.subr.mxu0 0.0
      %1328 = vmatpush1.msra.mxu0 %v1317
      %1329 = vmatprep.subr.mxu0 0.0
      %1330 = vmatpush1.msra.mxu0 %v1316
      %1331 = vmatprep.subr.mxu0 0.0
      %1332 = vmatpush1.msra.mxu0 %v1315
      %1333 = vmatprep.subr.mxu0 0.0
      %1334 = vmatpush1.msra.mxu0 %v1314
      %1335 = vmatprep.subr.mxu0 0.0
      %1336 = vmatpush1.msra.mxu0 %v1313
      %1337 = vmatprep.subr.mxu0 0.0
      %1338 = vmatpush1.msra.mxu0 %v1312
      %1339 = vmatprep.subr.mxu0 0.0
      %1340 = vmatpush1.msra.mxu0 %v1311
      %1341 = vmatprep.subr.mxu0 0.0
      %1342 = vmatpush1.msra.mxu0 %v1310
      %1343 = vmatprep.subr.mxu0 0.0
      %1344 = vmatpush1.msra.mxu0 %v1309
      %1345 = vmatprep.subr.mxu0 0.0
      %1346 = vmatpush1.msra.mxu0 %v1308
      %1347 = vmatprep.subr.mxu0 0.0
      %1348 = vmatpush1.msra.mxu0 %v1307
      %1349 = vmatprep.subr.mxu0 0.0
      %1350 = vmatpush1.msra.mxu0 %v1306
      %1351 = vmatprep.subr.mxu0 0.0
      %1352 = vmatpush1.msra.mxu0 %v1305
      %1353 = vmatprep.subr.mxu0 0.0
      %1354 = vmatpush2.msra.mxu0 0.0
      %1355 = vmatprep.subr.mxu0 0.0
      %1356 = vmatpush2.msra.mxu0 0.0
      %1357 = vmatprep.subr.mxu0 0.0
      %1358 = vmatpush2.msra.mxu0 0.0
      %1359 = vmatprep.subr.mxu0 0.0
      %1360 = vmatpush2.msra.mxu0 0.0
      %1361 = vmatprep.subr.mxu0 0.0
      %1362 = vmatpush2.msra.mxu0 0.0
      %1363 = vmatprep.subr.mxu0 0.0
      %1364 = vmatpush2.msra.mxu0 0.0
      %1365 = vmatprep.subr.mxu0 0.0
      %1366 = vmatpush2.msra.mxu0 0.0
      %1367 = vmatprep.subr.mxu0 0.0
      %1368 = vmatpush2.msra.mxu0 0.0
      %1369 = vmatprep.subr.mxu0 0.0
      %1370 = vmatpush2.msra.mxu0 0.0
      %1371 = vmatprep.subr.mxu0 0.0
      %1372 = vmatpush2.msra.mxu0 0.0
      %1373 = vmatprep.subr.mxu0 0.0
      %1374 = vmatpush2.msra.mxu0 0.0
      %1375 = vmatprep.subr.mxu0 0.0
      %1376 = vmatpush2.msra.mxu0 0.0
      %1377 = vmatprep.subr.mxu0 0.0
      %1378 = vmatpush2.msra.mxu0 0.0
      %1379 = vmatprep.subr.mxu0 0.0
      %1380 = vmatpush2.msra.mxu0 0.0
      %1381 = vmatprep.subr.mxu0 0.0
      %1382 = vmatpush2.msra.mxu0 0.0
      %1383 = vmatprep.subr.mxu0 0.0
      %1384 = vmatpush2.msra.mxu0 0.0
      %1385 = vmatprep.mubr.f32.mxu0 0.0
      %1386 = vmatmul.mubr.f32.gmra.mxu0 %v1289
      %v1387 = vpop.f32.mrf.mxu0
      %v1388 = vadd.f32 0.0, %v1387
      %v1389 = vpop.f32.mrf.mxu0
      %1390 = vmatprep.mubr.f32.mxu0 0.0
      %1391 = vmatmul.mubr.f32.gmra.mxu0 %v1290
      %v1392 = vpop.f32.mrf.mxu0
      %v1393 = vadd.f32 0.0, %v1392
      %v1394 = vpop.f32.mrf.mxu0
      %1395 = vmatprep.mubr.f32.mxu0 0.0
      %1396 = vmatmul.mubr.f32.gmra.mxu0 %v1291
      %v1397 = vpop.f32.mrf.mxu0
      %v1398 = vadd.f32 0.0, %v1397
      %v1399 = vpop.f32.mrf.mxu0
      %1400 = vmatprep.mubr.f32.mxu0 0.0
      %1401 = vmatmul.mubr.f32.gmra.mxu0 %v1292
      %v1402 = vpop.f32.mrf.mxu0
      %v1403 = vadd.f32 0.0, %v1402
      %v1404 = vpop.f32.mrf.mxu0
      %1405 = vmatprep.mubr.f32.mxu0 0.0
      %1406 = vmatmul.mubr.f32.gmra.mxu0 %v1293
      %v1407 = vpop.f32.mrf.mxu0
      %v1408 = vadd.f32 0.0, %v1407
      %v1409 = vpop.f32.mrf.mxu0
      %1410 = vmatprep.mubr.f32.mxu0 0.0
      %1411 = vmatmul.mubr.f32.gmra.mxu0 %v1294
      %v1412 = vpop.f32.mrf.mxu0
      %v1413 = vadd.f32 0.0, %v1412
      %v1414 = vpop.f32.mrf.mxu0
      %1415 = vmatprep.mubr.f32.mxu0 0.0
      %1416 = vmatmul.mubr.f32.gmra.mxu0 %v1295
      %v1417 = vpop.f32.mrf.mxu0
      %v1418 = vadd.f32 0.0, %v1417
      %v1419 = vpop.f32.mrf.mxu0
      %1420 = vmatprep.mubr.f32.mxu0 0.0
      %1421 = vmatmul.mubr.f32.gmra.mxu0 %v1296
      %v1422 = vpop.f32.mrf.mxu0
      %v1423 = vadd.f32 0.0, %v1422
      %v1424 = vpop.f32.mrf.mxu0
      %1425 = vmatprep.mubr.f32.mxu0 0.0
      %1426 = vmatmul.mubr.f32.gmra.mxu0 %v1297
      %v1427 = vpop.f32.mrf.mxu0
      %v1428 = vadd.f32 0.0, %v1427
      %v1429 = vpop.f32.mrf.mxu0
      %1430 = vmatprep.mubr.f32.mxu0 0.0
      %1431 = vmatmul.mubr.f32.gmra.mxu0 %v1298
      %v1432 = vpop.f32.mrf.mxu0
      %v1433 = vadd.f32 0.0, %v1432
      %v1434 = vpop.f32.mrf.mxu0
      %1435 = vmatprep.mubr.f32.mxu0 0.0
      %1436 = vmatmul.mubr.f32.gmra.mxu0 %v1299
      %v1437 = vpop.f32.mrf.mxu0
      %v1438 = vadd.f32 0.0, %v1437
      %v1439 = vpop.f32.mrf.mxu0
      %1440 = vmatprep.mubr.f32.mxu0 0.0
      %1441 = vmatmul.mubr.f32.gmra.mxu0 %v1300
      %v1442 = vpop.f32.mrf.mxu0
      %v1443 = vadd.f32 0.0, %v1442
      %v1444 = vpop.f32.mrf.mxu0
      %1445 = vmatprep.mubr.f32.mxu0 0.0
      %1446 = vmatmul.mubr.f32.gmra.mxu0 %v1301
      %v1447 = vpop.f32.mrf.mxu0
      %v1448 = vadd.f32 0.0, %v1447
      %v1449 = vpop.f32.mrf.mxu0
      %1450 = vmatprep.mubr.f32.mxu0 0.0
      %1451 = vmatmul.mubr.f32.gmra.mxu0 %v1302
      %v1452 = vpop.f32.mrf.mxu0
      %v1453 = vadd.f32 0.0, %v1452
      %v1454 = vpop.f32.mrf.mxu0
      %1455 = vmatprep.mubr.f32.mxu0 0.0
      %1456 = vmatmul.mubr.f32.gmra.mxu0 %v1303
      %v1457 = vpop.f32.mrf.mxu0
      %v1458 = vadd.f32 0.0, %v1457
      %v1459 = vpop.f32.mrf.mxu0
      %1460 = vmatprep.mubr.f32.mxu0 0.0
      %1461 = vmatmul.mubr.f32.gmra.mxu0 %v1304
      %v1462 = vpop.f32.mrf.mxu0
      %v1463 = vadd.f32 0.0, %v1462
      %v1464 = vpop.f32.mrf.mxu0
      %1465 = vdwg.mxu0
      %1466 = vmatprep.subr.mxu0 0.0
      %1467 = vmatpush1.msra.mxu0 %v1224
      %1468 = vmatprep.subr.mxu0 0.0
      %1469 = vmatpush1.msra.mxu0 %v1223
      %1470 = vmatprep.subr.mxu0 0.0
      %1471 = vmatpush1.msra.mxu0 %v1222
      %1472 = vmatprep.subr.mxu0 0.0
      %1473 = vmatpush1.msra.mxu0 %v1221
      %1474 = vmatprep.subr.mxu0 0.0
      %1475 = vmatpush1.msra.mxu0 %v1220
      %1476 = vmatprep.subr.mxu0 0.0
      %1477 = vmatpush1.msra.mxu0 %v1219
      %1478 = vmatprep.subr.mxu0 0.0
      %1479 = vmatpush1.msra.mxu0 %v1218
      %1480 = vmatprep.subr.mxu0 0.0
      %1481 = vmatpush1.msra.mxu0 %v1217
      %1482 = vmatprep.subr.mxu0 0.0
      %1483 = vmatpush1.msra.mxu0 %v1216
      %1484 = vmatprep.subr.mxu0 0.0
      %1485 = vmatpush1.msra.mxu0 %v1215
      %1486 = vmatprep.subr.mxu0 0.0
      %1487 = vmatpush1.msra.mxu0 %v1214
      %1488 = vmatprep.subr.mxu0 0.0
      %1489 = vmatpush1.msra.mxu0 %v1213
      %1490 = vmatprep.subr.mxu0 0.0
      %1491 = vmatpush1.msra.mxu0 %v1212
      %1492 = vmatprep.subr.mxu0 0.0
      %1493 = vmatpush1.msra.mxu0 %v1211
      %1494 = vmatprep.subr.mxu0 0.0
      %1495 = vmatpush1.msra.mxu0 %v1210
      %1496 = vmatprep.subr.mxu0 0.0
      %1497 = vmatpush1.msra.mxu0 %v1209
      %1498 = vmatprep.subr.mxu0 0.0
      %1499 = vmatpush2.msra.mxu0 0.0
      %1500 = vmatprep.subr.mxu0 0.0
      %1501 = vmatpush2.msra.mxu0 0.0
      %1502 = vmatprep.subr.mxu0 0.0
      %1503 = vmatpush2.msra.mxu0 0.0
      %1504 = vmatprep.subr.mxu0 0.0
      %1505 = vmatpush2.msra.mxu0 0.0
      %1506 = vmatprep.subr.mxu0 0.0
      %1507 = vmatpush2.msra.mxu0 0.0
      %1508 = vmatprep.subr.mxu0 0.0
      %1509 = vmatpush2.msra.mxu0 0.0
      %1510 = vmatprep.subr.mxu0 0.0
      %1511 = vmatpush2.msra.mxu0 0.0
      %1512 = vmatprep.subr.mxu0 0.0
      %1513 = vmatpush2.msra.mxu0 0.0
      %1514 = vmatprep.subr.mxu0 0.0
      %1515 = vmatpush2.msra.mxu0 0.0
      %1516 = vmatprep.subr.mxu0 0.0
      %1517 = vmatpush2.msra.mxu0 0.0
      %1518 = vmatprep.subr.mxu0 0.0
      %1519 = vmatpush2.msra.mxu0 0.0
      %1520 = vmatprep.subr.mxu0 0.0
      %1521 = vmatpush2.msra.mxu0 0.0
      %1522 = vmatprep.subr.mxu0 0.0
      %1523 = vmatpush2.msra.mxu0 0.0
      %1524 = vmatprep.subr.mxu0 0.0
      %1525 = vmatpush2.msra.mxu0 0.0
      %1526 = vmatprep.subr.mxu0 0.0
      %1527 = vmatpush2.msra.mxu0 0.0
      %1528 = vmatprep.subr.mxu0 0.0
      %1529 = vmatpush2.msra.mxu0 0.0
      %1530 = vmatprep.mubr.f32.mxu0 0.0
      %1531 = vmatmul.mubr.f32.gmra.mxu0 %v1192
      %v1532 = vpop.f32.mrf.mxu0
      %v1533 = vadd.f32 %v1388, %v1532
      %v1534 = vpop.f32.mrf.mxu0
      %1535 = vmatprep.mubr.f32.mxu0 0.0
      %1536 = vmatmul.mubr.f32.gmra.mxu0 %v1193
      %v1537 = vpop.f32.mrf.mxu0
      %v1538 = vadd.f32 %v1393, %v1537
      %v1539 = vpop.f32.mrf.mxu0
      %1540 = vmatprep.mubr.f32.mxu0 0.0
      %1541 = vmatmul.mubr.f32.gmra.mxu0 %v1194
      %v1542 = vpop.f32.mrf.mxu0
      %v1543 = vadd.f32 %v1398, %v1542
      %v1544 = vpop.f32.mrf.mxu0
      %1545 = vmatprep.mubr.f32.mxu0 0.0
      %1546 = vmatmul.mubr.f32.gmra.mxu0 %v1195
      %v1547 = vpop.f32.mrf.mxu0
      %v1548 = vadd.f32 %v1403, %v1547
      %v1549 = vpop.f32.mrf.mxu0
      %1550 = vmatprep.mubr.f32.mxu0 0.0
      %1551 = vmatmul.mubr.f32.gmra.mxu0 %v1196
      %v1552 = vpop.f32.mrf.mxu0
      %v1553 = vadd.f32 %v1408, %v1552
      %v1554 = vpop.f32.mrf.mxu0
      %1555 = vmatprep.mubr.f32.mxu0 0.0
      %1556 = vmatmul.mubr.f32.gmra.mxu0 %v1197
      %v1557 = vpop.f32.mrf.mxu0
      %v1558 = vadd.f32 %v1413, %v1557
      %v1559 = vpop.f32.mrf.mxu0
      %1560 = vmatprep.mubr.f32.mxu0 0.0
      %1561 = vmatmul.mubr.f32.gmra.mxu0 %v1198
      %v1562 = vpop.f32.mrf.mxu0
      %v1563 = vadd.f32 %v1418, %v1562
      %v1564 = vpop.f32.mrf.mxu0
      %1565 = vmatprep.mubr.f32.mxu0 0.0
      %1566 = vmatmul.mubr.f32.gmra.mxu0 %v1199
      %v1567 = vpop.f32.mrf.mxu0
      %v1568 = vadd.f32 %v1423, %v1567
      %v1569 = vpop.f32.mrf.mxu0
      %1570 = vmatprep.mubr.f32.mxu0 0.0
      %1571 = vmatmul.mubr.f32.gmra.mxu0 %v1200
      %v1572 = vpop.f32.mrf.mxu0
      %v1573 = vadd.f32 %v1428, %v1572
      %v1574 = vpop.f32.mrf.mxu0
      %1575 = vmatprep.mubr.f32.mxu0 0.0
      %1576 = vmatmul.mubr.f32.gmra.mxu0 %v1201
      %v1577 = vpop.f32.mrf.mxu0
      %v1578 = vadd.f32 %v1433, %v1577
      %v1579 = vpop.f32.mrf.mxu0
      %1580 = vmatprep.mubr.f32.mxu0 0.0
      %1581 = vmatmul.mubr.f32.gmra.mxu0 %v1202
      %v1582 = vpop.f32.mrf.mxu0
      %v1583 = vadd.f32 %v1438, %v1582
      %v1584 = vpop.f32.mrf.mxu0
      %1585 = vmatprep.mubr.f32.mxu0 0.0
      %1586 = vmatmul.mubr.f32.gmra.mxu0 %v1203
      %v1587 = vpop.f32.mrf.mxu0
      %v1588 = vadd.f32 %v1443, %v1587
      %v1589 = vpop.f32.mrf.mxu0
      %1590 = vmatprep.mubr.f32.mxu0 0.0
      %1591 = vmatmul.mubr.f32.gmra.mxu0 %v1204
      %v1592 = vpop.f32.mrf.mxu0
      %v1593 = vadd.f32 %v1448, %v1592
      %v1594 = vpop.f32.mrf.mxu0
      %1595 = vmatprep.mubr.f32.mxu0 0.0
      %1596 = vmatmul.mubr.f32.gmra.mxu0 %v1205
      %v1597 = vpop.f32.mrf.mxu0
      %v1598 = vadd.f32 %v1453, %v1597
      %v1599 = vpop.f32.mrf.mxu0
      %1600 = vmatprep.mubr.f32.mxu0 0.0
      %1601 = vmatmul.mubr.f32.gmra.mxu0 %v1206
      %v1602 = vpop.f32.mrf.mxu0
      %v1603 = vadd.f32 %v1458, %v1602
      %v1604 = vpop.f32.mrf.mxu0
      %1605 = vmatprep.mubr.f32.mxu0 0.0
      %1606 = vmatmul.mubr.f32.gmra.mxu0 %v1207
      %v1607 = vpop.f32.mrf.mxu0
      %v1608 = vadd.f32 %v1463, %v1607
      %v1609 = vpop.f32.mrf.mxu0
      %1610 = vdwg.mxu0
      %v1611 = vrot.slane %v1192, 1
      %v1612 = vrot.slane %v1193, 1
      %v1613 = vsel %vm894, %v1611, %v1612
      %v1614 = vrot.slane %v1194, 1
      %v1615 = vsel %vm894, %v1612, %v1614
      %v1616 = vrot.slane %v1195, 1
      %v1617 = vsel %vm894, %v1614, %v1616
      %v1618 = vrot.slane %v1196, 1
      %v1619 = vsel %vm894, %v1616, %v1618
      %v1620 = vrot.slane %v1197, 1
      %v1621 = vsel %vm894, %v1618, %v1620
      %v1622 = vrot.slane %v1198, 1
      %v1623 = vsel %vm894, %v1620, %v1622
      %v1624 = vrot.slane %v1199, 1
      %v1625 = vsel %vm894, %v1622, %v1624
      %v1626 = vrot.slane %v1200, 1
      %v1627 = vsel %vm894, %v1624, %v1626
      %v1628 = vrot.slane %v1201, 1
      %v1629 = vsel %vm894, %v1626, %v1628
      %v1630 = vrot.slane %v1202, 1
      %v1631 = vsel %vm894, %v1628, %v1630
      %v1632 = vrot.slane %v1203, 1
      %v1633 = vsel %vm894, %v1630, %v1632
      %v1634 = vrot.slane %v1204, 1
      %v1635 = vsel %vm894, %v1632, %v1634
      %v1636 = vrot.slane %v1205, 1
      %v1637 = vsel %vm894, %v1634, %v1636
      %v1638 = vrot.slane %v1206, 1
      %v1639 = vsel %vm894, %v1636, %v1638
      %v1640 = vrot.slane %v1207, 1
      %v1641 = vsel %vm894, %v1638, %v1640
      %v1658 = vsel %vm894, %v1640, 0.0
      %v1659 = vsel %vm959, %v1613, 0.0
      %v1660 = vsel %vm960, %v1615, 0.0
      %v1661 = vsel %vm961, %v1617, 0.0
      %v1662 = vsel %vm962, %v1619, 0.0
      %v1663 = vsel %vm963, %v1621, 0.0
      %v1664 = vsel %vm964, %v1623, 0.0
      %v1665 = vsel %vm965, %v1625, 0.0
      %v1666 = vsel %vm966, %v1627, 0.0
      %v1667 = vsel %vm967, %v1629, 0.0
      %v1668 = vsel %vm968, %v1631, 0.0
      %v1669 = vsel %vm969, %v1633, 0.0
      %v1670 = vsel %vm970, %v1635, 0.0
      %v1671 = vsel %vm971, %v1637, 0.0
      %v1672 = vsel %vm972, %v1639, 0.0
      %v1673 = vsel %vm973, %v1641, 0.0
      %v1674 = vsel %vm974, %v1658, 0.0
      %s1675 = scalar_lea.vmem %s2, 256
      %v1676 = vld [vmem:[%s1675] sm:$0xff]
      %v1677 = vld [vmem:[%s1675 + $0x8] sm:$0xff]
      %v1678 = vld [vmem:[%s1675 + $0x10] sm:$0xff]
      %v1679 = vld [vmem:[%s1675 + $0x18] sm:$0xff]
      %v1680 = vld [vmem:[%s1675 + $0x20] sm:$0xff]
      %v1681 = vld [vmem:[%s1675 + $0x28] sm:$0xff]
      %v1682 = vld [vmem:[%s1675 + $0x30] sm:$0xff]
      %v1683 = vld [vmem:[%s1675 + $0x38] sm:$0xff]
      %v1684 = vld [vmem:[%s1675 + $0x40] sm:$0xff]
      %v1685 = vld [vmem:[%s1675 + $0x48] sm:$0xff]
      %v1686 = vld [vmem:[%s1675 + $0x50] sm:$0xff]
      %v1687 = vld [vmem:[%s1675 + $0x58] sm:$0xff]
      %v1688 = vld [vmem:[%s1675 + $0x60] sm:$0xff]
      %v1689 = vld [vmem:[%s1675 + $0x68] sm:$0xff]
      %v1690 = vld [vmem:[%s1675 + $0x70] sm:$0xff]
      %v1691 = vld [vmem:[%s1675 + $0x78] sm:$0xff]
      %1692 = vmatprep.subr.mxu0 0.0
      %1693 = vmatpush1.msra.mxu0 %v1691
      %1694 = vmatprep.subr.mxu0 0.0
      %1695 = vmatpush1.msra.mxu0 %v1690
      %1696 = vmatprep.subr.mxu0 0.0
      %1697 = vmatpush1.msra.mxu0 %v1689
      %1698 = vmatprep.subr.mxu0 0.0
      %1699 = vmatpush1.msra.mxu0 %v1688
      %1700 = vmatprep.subr.mxu0 0.0
      %1701 = vmatpush1.msra.mxu0 %v1687
      %1702 = vmatprep.subr.mxu0 0.0
      %1703 = vmatpush1.msra.mxu0 %v1686
      %1704 = vmatprep.subr.mxu0 0.0
      %1705 = vmatpush1.msra.mxu0 %v1685
      %1706 = vmatprep.subr.mxu0 0.0
      %1707 = vmatpush1.msra.mxu0 %v1684
      %1708 = vmatprep.subr.mxu0 0.0
      %1709 = vmatpush1.msra.mxu0 %v1683
      %1710 = vmatprep.subr.mxu0 0.0
      %1711 = vmatpush1.msra.mxu0 %v1682
      %1712 = vmatprep.subr.mxu0 0.0
      %1713 = vmatpush1.msra.mxu0 %v1681
      %1714 = vmatprep.subr.mxu0 0.0
      %1715 = vmatpush1.msra.mxu0 %v1680
      %1716 = vmatprep.subr.mxu0 0.0
      %1717 = vmatpush1.msra.mxu0 %v1679
      %1718 = vmatprep.subr.mxu0 0.0
      %1719 = vmatpush1.msra.mxu0 %v1678
      %1720 = vmatprep.subr.mxu0 0.0
      %1721 = vmatpush1.msra.mxu0 %v1677
      %1722 = vmatprep.subr.mxu0 0.0
      %1723 = vmatpush1.msra.mxu0 %v1676
      %1724 = vmatprep.subr.mxu0 0.0
      %1725 = vmatpush2.msra.mxu0 0.0
      %1726 = vmatprep.subr.mxu0 0.0
      %1727 = vmatpush2.msra.mxu0 0.0
      %1728 = vmatprep.subr.mxu0 0.0
      %1729 = vmatpush2.msra.mxu0 0.0
      %1730 = vmatprep.subr.mxu0 0.0
      %1731 = vmatpush2.msra.mxu0 0.0
      %1732 = vmatprep.subr.mxu0 0.0
      %1733 = vmatpush2.msra.mxu0 0.0
      %1734 = vmatprep.subr.mxu0 0.0
      %1735 = vmatpush2.msra.mxu0 0.0
      %1736 = vmatprep.subr.mxu0 0.0
      %1737 = vmatpush2.msra.mxu0 0.0
      %1738 = vmatprep.subr.mxu0 0.0
      %1739 = vmatpush2.msra.mxu0 0.0
      %1740 = vmatprep.subr.mxu0 0.0
      %1741 = vmatpush2.msra.mxu0 0.0
      %1742 = vmatprep.subr.mxu0 0.0
      %1743 = vmatpush2.msra.mxu0 0.0
      %1744 = vmatprep.subr.mxu0 0.0
      %1745 = vmatpush2.msra.mxu0 0.0
      %1746 = vmatprep.subr.mxu0 0.0
      %1747 = vmatpush2.msra.mxu0 0.0
      %1748 = vmatprep.subr.mxu0 0.0
      %1749 = vmatpush2.msra.mxu0 0.0
      %1750 = vmatprep.subr.mxu0 0.0
      %1751 = vmatpush2.msra.mxu0 0.0
      %1752 = vmatprep.subr.mxu0 0.0
      %1753 = vmatpush2.msra.mxu0 0.0
      %1754 = vmatprep.subr.mxu0 0.0
      %1755 = vmatpush2.msra.mxu0 0.0
      %1756 = vmatprep.mubr.f32.mxu0 0.0
      %1757 = vmatmul.mubr.f32.gmra.mxu0 %v1659
      %v1758 = vpop.f32.mrf.mxu0
      %v1759 = vadd.f32 0.0, %v1758
      %v1760 = vpop.f32.mrf.mxu0
      %1761 = vmatprep.mubr.f32.mxu0 0.0
      %1762 = vmatmul.mubr.f32.gmra.mxu0 %v1660
      %v1763 = vpop.f32.mrf.mxu0
      %v1764 = vadd.f32 0.0, %v1763
      %v1765 = vpop.f32.mrf.mxu0
      %1766 = vmatprep.mubr.f32.mxu0 0.0
      %1767 = vmatmul.mubr.f32.gmra.mxu0 %v1661
      %v1768 = vpop.f32.mrf.mxu0
      %v1769 = vadd.f32 0.0, %v1768
      %v1770 = vpop.f32.mrf.mxu0
      %1771 = vmatprep.mubr.f32.mxu0 0.0
      %1772 = vmatmul.mubr.f32.gmra.mxu0 %v1662
      %v1773 = vpop.f32.mrf.mxu0
      %v1774 = vadd.f32 0.0, %v1773
      %v1775 = vpop.f32.mrf.mxu0
      %1776 = vmatprep.mubr.f32.mxu0 0.0
      %1777 = vmatmul.mubr.f32.gmra.mxu0 %v1663
      %v1778 = vpop.f32.mrf.mxu0
      %v1779 = vadd.f32 0.0, %v1778
      %v1780 = vpop.f32.mrf.mxu0
      %1781 = vmatprep.mubr.f32.mxu0 0.0
      %1782 = vmatmul.mubr.f32.gmra.mxu0 %v1664
      %v1783 = vpop.f32.mrf.mxu0
      %v1784 = vadd.f32 0.0, %v1783
      %v1785 = vpop.f32.mrf.mxu0
      %1786 = vmatprep.mubr.f32.mxu0 0.0
      %1787 = vmatmul.mubr.f32.gmra.mxu0 %v1665
      %v1788 = vpop.f32.mrf.mxu0
      %v1789 = vadd.f32 0.0, %v1788
      %v1790 = vpop.f32.mrf.mxu0
      %1791 = vmatprep.mubr.f32.mxu0 0.0
      %1792 = vmatmul.mubr.f32.gmra.mxu0 %v1666
      %v1793 = vpop.f32.mrf.mxu0
      %v1794 = vadd.f32 0.0, %v1793
      %v1795 = vpop.f32.mrf.mxu0
      %1796 = vmatprep.mubr.f32.mxu0 0.0
      %1797 = vmatmul.mubr.f32.gmra.mxu0 %v1667
      %v1798 = vpop.f32.mrf.mxu0
      %v1799 = vadd.f32 0.0, %v1798
      %v1800 = vpop.f32.mrf.mxu0
      %1801 = vmatprep.mubr.f32.mxu0 0.0
      %1802 = vmatmul.mubr.f32.gmra.mxu0 %v1668
      %v1803 = vpop.f32.mrf.mxu0
      %v1804 = vadd.f32 0.0, %v1803
      %v1805 = vpop.f32.mrf.mxu0
      %1806 = vmatprep.mubr.f32.mxu0 0.0
      %1807 = vmatmul.mubr.f32.gmra.mxu0 %v1669
      %v1808 = vpop.f32.mrf.mxu0
      %v1809 = vadd.f32 0.0, %v1808
      %v1810 = vpop.f32.mrf.mxu0
      %1811 = vmatprep.mubr.f32.mxu0 0.0
      %1812 = vmatmul.mubr.f32.gmra.mxu0 %v1670
      %v1813 = vpop.f32.mrf.mxu0
      %v1814 = vadd.f32 0.0, %v1813
      %v1815 = vpop.f32.mrf.mxu0
      %1816 = vmatprep.mubr.f32.mxu0 0.0
      %1817 = vmatmul.mubr.f32.gmra.mxu0 %v1671
      %v1818 = vpop.f32.mrf.mxu0
      %v1819 = vadd.f32 0.0, %v1818
      %v1820 = vpop.f32.mrf.mxu0
      %1821 = vmatprep.mubr.f32.mxu0 0.0
      %1822 = vmatmul.mubr.f32.gmra.mxu0 %v1672
      %v1823 = vpop.f32.mrf.mxu0
      %v1824 = vadd.f32 0.0, %v1823
      %v1825 = vpop.f32.mrf.mxu0
      %1826 = vmatprep.mubr.f32.mxu0 0.0
      %1827 = vmatmul.mubr.f32.gmra.mxu0 %v1673
      %v1828 = vpop.f32.mrf.mxu0
      %v1829 = vadd.f32 0.0, %v1828
      %v1830 = vpop.f32.mrf.mxu0
      %1831 = vmatprep.mubr.f32.mxu0 0.0
      %1832 = vmatmul.mubr.f32.gmra.mxu0 %v1674
      %v1833 = vpop.f32.mrf.mxu0
      %v1834 = vadd.f32 0.0, %v1833
      %v1835 = vpop.f32.mrf.mxu0
      %1836 = vdwg.mxu0
      %v1837 = vadd.f32 %v1533, %v1759
      %v1838 = vadd.f32 %v1538, %v1764
      %v1839 = vadd.f32 %v1543, %v1769
      %v1840 = vadd.f32 %v1548, %v1774
      %v1841 = vadd.f32 %v1553, %v1779
      %v1842 = vadd.f32 %v1558, %v1784
      %v1843 = vadd.f32 %v1563, %v1789
      %v1844 = vadd.f32 %v1568, %v1794
      %v1845 = vadd.f32 %v1573, %v1799
      %v1846 = vadd.f32 %v1578, %v1804
      %v1847 = vadd.f32 %v1583, %v1809
      %v1848 = vadd.f32 %v1588, %v1814
      %v1849 = vadd.f32 %v1593, %v1819
      %v1850 = vadd.f32 %v1598, %v1824
      %v1851 = vadd.f32 %v1603, %v1829
      %v1852 = vadd.f32 %v1608, %v1834
      %s1853 = scalar_lea.vmem %s3, 1
      %v1854 = vld [vmem:[%s1853] sm:$0x1]
      %v1856 = vlaneseq
      %v1857 = vshrl.u32 %v1856, 7
      %v1858 = vsub.s32 0, %v1857
      %v1859 = vrot.slane %v1854, %v1858
      %v1861 = vadd.f32 %v1837, %v1859
      %v1862 = vadd.f32 %v1838, %v1859
      %v1863 = vadd.f32 %v1839, %v1859
      %v1864 = vadd.f32 %v1840, %v1859
      %v1865 = vadd.f32 %v1841, %v1859
      %v1866 = vadd.f32 %v1842, %v1859
      %v1867 = vadd.f32 %v1843, %v1859
      %v1868 = vadd.f32 %v1844, %v1859
      %v1869 = vadd.f32 %v1845, %v1859
      %v1870 = vadd.f32 %v1846, %v1859
      %v1871 = vadd.f32 %v1847, %v1859
      %v1872 = vadd.f32 %v1848, %v1859
      %v1873 = vadd.f32 %v1849, %v1859
      %v1874 = vadd.f32 %v1850, %v1859
      %v1875 = vadd.f32 %v1851, %v1859
      %v1876 = vadd.f32 %v1852, %v1859
      %v1877 = vadd.f32 %v1861, %v442
      %v1878 = vadd.f32 %v1862, %v443
      %v1879 = vadd.f32 %v1863, %v444
      %v1880 = vadd.f32 %v1864, %v445
      %v1881 = vadd.f32 %v1865, %v446
      %v1882 = vadd.f32 %v1866, %v447
      %v1883 = vadd.f32 %v1867, %v448
      %v1884 = vadd.f32 %v1868, %v449
      %v1885 = vadd.f32 %v1869, %v450
      %v1886 = vadd.f32 %v1870, %v451
      %v1887 = vadd.f32 %v1871, %v452
      %v1888 = vadd.f32 %v1872, %v453
      %v1889 = vadd.f32 %v1873, %v454
      %v1890 = vadd.f32 %v1874, %v455
      %v1891 = vadd.f32 %v1875, %v456
      %v1892 = vadd.f32 %v1876, %v457
      %v1893 = vmax.f32 %v1877, 0.0
      %v1894 = vmax.f32 %v1878, 0.0
      %v1895 = vmax.f32 %v1879, 0.0
      %v1896 = vmax.f32 %v1880, 0.0
      %v1897 = vmax.f32 %v1881, 0.0
      %v1898 = vmax.f32 %v1882, 0.0
      %v1899 = vmax.f32 %v1883, 0.0
      %v1900 = vmax.f32 %v1884, 0.0
      %v1901 = vmax.f32 %v1885, 0.0
      %v1902 = vmax.f32 %v1886, 0.0
      %v1903 = vmax.f32 %v1887, 0.0
      %v1904 = vmax.f32 %v1888, 0.0
      %v1905 = vmax.f32 %v1889, 0.0
      %v1906 = vmax.f32 %v1890, 0.0
      %v1907 = vmax.f32 %v1891, 0.0
      %v1908 = vmax.f32 %v1892, 0.0
      %1909 = vst [vmem:[%s199] sm:$0xff] %v1893
      %1910 = vst [vmem:[%s199 + $0x8] sm:$0xff] %v1894
      %1911 = vst [vmem:[%s199 + $0x10] sm:$0xff] %v1895
      %1912 = vst [vmem:[%s199 + $0x18] sm:$0xff] %v1896
      %1913 = vst [vmem:[%s199 + $0x20] sm:$0xff] %v1897
      %1914 = vst [vmem:[%s199 + $0x28] sm:$0xff] %v1898
      %1915 = vst [vmem:[%s199 + $0x30] sm:$0xff] %v1899
      %1916 = vst [vmem:[%s199 + $0x38] sm:$0xff] %v1900
      %1917 = vst [vmem:[%s199 + $0x40] sm:$0xff] %v1901
      %1918 = vst [vmem:[%s199 + $0x48] sm:$0xff] %v1902
      %1919 = vst [vmem:[%s199 + $0x50] sm:$0xff] %v1903
      %1920 = vst [vmem:[%s199 + $0x58] sm:$0xff] %v1904
      %1921 = vst [vmem:[%s199 + $0x60] sm:$0xff] %v1905
      %1922 = vst [vmem:[%s199 + $0x68] sm:$0xff] %v1906
      %1923 = vst [vmem:[%s199 + $0x70] sm:$0xff] %v1907
      %1924 = vst [vmem:[%s199 + $0x78] sm:$0xff] %v1908
      %s1925 = smul.u32 16, %s15
      %p1926 = scmp.lt.s32.totalorder %s1925, 31
      %s1927 = scalar_select %p1926, %s1925, 31
      %s1928 = smul.addr %s1927, 8
      %s1929 = scalar_lea.vmem %s4, %s1928
      // Predicated region
      $region37: #{resblock_forward.1} parent=35 // pred_check
        %p1930 = pneg %p122
      $region38: #{resblock_forward.1} parent=35 // pred_check_branch
        %1932 = sbr.rel (%p1930) target = $region40
      $region39: #{resblock_forward.1} parent=35 // pred_region
        %s1933 = smul.u32 16, %s15
      $region40: #{resblock_forward.1} parent=35 // pred_fallthru
        _
    $region36: #{resblock_forward.1} parent=5 // pred_fallthru
      _
    %p1934 = scmp.le.s32.totalorder 2, %s10
    // Predicated region
    $region41: #{resblock_forward.1} parent=5 // pred_check
      %p1935 = pneg %p1934
    $region42: #{resblock_forward.1} parent=5 // pred_check_branch
      %1937 = sbr.rel (%p1935) target = $region44
    $region43: #{resblock_forward.1} parent=5 // pred_region
      %s1938 = ssub.s32 %s10, 2
      // Predicated region
      $region45: #{resblock_forward.1} parent=43 // pred_check
        %p1939 = pneg %p128
      $region46: #{resblock_forward.1} parent=43 // pred_check_branch
        %1941 = sbr.rel (%p1939) target = $region48
      $region47: #{resblock_forward.1} parent=43 // pred_region
        %s1942 = smul.u32 16, %s16
        %p1943 = scmp.lt.s32.totalorder %s1942, 31
        %s1944 = scalar_select %p1943, %s1942, 31
        %s1945 = smul.addr %s1944, 8
        %s1946 = scalar_lea.vmem %s4, %s1945
      $region48: #{resblock_forward.1} parent=43 // pred_fallthru
        _
    $region44: #{resblock_forward.1} parent=5 // pred_fallthru
      _
  $region6: #{resblock_forward.1} parent=0 // loop_footer
    %s14 = sadd.s32 1, %s10
  $region7: #{resblock_forward.1} parent=0 // loop_footer_branch
    %9 = sbr.rel target = $region3
  $region8: #{resblock_forward.1} parent=0 // loop_exit
    _

</llo_original>
